<compile_context>
chip_gen: v5e
topology: v5e:2x2
jax: 0.10.0
libtpu: 0.0.40
codegen_flags: <defaults>
</compile_context>

<pallas_src>
import jax
import jax.numpy as jnp
from jax.experimental import pallas as pl
from jax.experimental.pallas import tpu as pltpu

# Sizes consistent with the module's __init__ (hidden fixed to 128).
VOCAB = 128      # vocab_size
EMBED = 32       # embedding_dim
CONTEXT = 4      # context_size
HIDDEN = 128     # hidden_size
BATCH = 256      # number of contexts processed per call


def _pick_config(batch):
    """Choose (batch tile, fused-K flag) per TPU generation."""
    kind = ""
    try:
        kind = jax.devices()[0].device_kind.lower()
    except Exception:  # pragma: no cover - defensive; default path below
        pass
    if "v7" in kind:
        # 2 TensorCores: keep >=2 grid steps and shard them with "parallel";
        # fused K=512 matmul (tb=128 one-hot fits comfortably in vregs/VMEM).
        tb = 128 if batch % 128 == 0 else batch
        fuse = tb <= 128
    else:
        # Single TensorCore (v5e/v6e/other): one big grid step amortizes the
        # ~0.35us/step pipeline overhead; keep the per-context K=128 loop
        # (native MXU width on v5e, avoids a (256,512) one-hot live set).
        if batch % 256 == 0:
            tb = 256
        elif batch % 128 == 0:
            tb = 128
        else:
            tb = batch
        fuse = False
    return tb, fuse


def _make_kernel(tb, fuse):
    def lm_kernel(ids_ref, w1f_ref, b1_ref, w2_ref, b2_ref, out_ref, *scratch):
        ids = ids_ref[...]                                        # (tb, CONTEXT) int32
        # Hoisted iota reused for every context's one-hot.
        vocab_iota = jax.lax.broadcasted_iota(jnp.int32, (tb, VOCAB), 1)

        if fuse:
            # --- fused path (v7x): one K=CONTEXT*VOCAB=512 matmul -----------
            oh_ref, = scratch                                     # (tb, 512) bf16 VMEM
            for c in range(CONTEXT):                              # 4 static 128-lane slab writes
                oh_ref[:, c * VOCAB:(c + 1) * VOCAB] = (
                    ids[:, c:c + 1] == vocab_iota).astype(jnp.bfloat16)
            acc = jnp.dot(oh_ref[...], w1f_ref[...],
                          preferred_element_type=jnp.float32) + b1_ref[...]
        else:
            # --- per-context path (v5e/v6e): 4 K=128 matmuls -----------------
            # Bias folded into the accumulator init (saves one full-tile add).
            acc = jnp.broadcast_to(b1_ref[...], (tb, HIDDEN))     # (tb, HIDDEN) f32
            for c in range(CONTEXT):
                onehot = (ids[:, c:c + 1] == vocab_iota).astype(jnp.bfloat16)
                acc = acc + jnp.dot(
                    onehot, w1f_ref[c * VOCAB:(c + 1) * VOCAB, :],
                    preferred_element_type=jnp.float32)           # (tb, HIDDEN)

        # --- relu (f32) ---
        h = jnp.maximum(acc, 0.0)                                 # (tb, HIDDEN)

        # --- linear2 (bf16 MXU inputs, f32 accumulate) ---
        logits = jnp.dot(h.astype(jnp.bfloat16), w2_ref[...],
                         preferred_element_type=jnp.float32) + b2_ref[...]

        # --- numerically-stable log_softmax along dim=1 (f32 epilogue) ---
        m = jnp.max(logits, axis=-1, keepdims=True)
        shifted = logits - m
        lse = jnp.log(jnp.sum(jnp.exp(shifted), axis=-1, keepdims=True))
        out_ref[...] = shifted - lse                              # (tb, VOCAB)

    return lm_kernel


def fold_embedding_into_w1(emb_f32, w1_f32):
    """Host-side fold: W1f[c] = emb @ W1[c*EMBED:(c+1)*EMBED], f32 fold, one bf16 cast.

    emb_f32: (VOCAB, EMBED) f32, w1_f32: (CONTEXT*EMBED, HIDDEN) f32.
    Returns (CONTEXT*VOCAB, HIDDEN) bf16.
    """
    w1_3d = w1_f32.reshape(CONTEXT, EMBED, HIDDEN)
    w1f = jnp.einsum("ve,ceh->cvh", emb_f32, w1_3d)              # (CONTEXT, VOCAB, HIDDEN)
    return w1f.reshape(CONTEXT * VOCAB, HIDDEN).astype(jnp.bfloat16)


def language_modeler_forward(ids, w1f, b1, w2, b2, *, tb=None, fuse=None):
    """ids: (B, CONTEXT) int32 token ids. Returns (B, VOCAB) f32 log-probs.

    w1f: (CONTEXT*VOCAB, HIDDEN) bf16  -- embedding folded into linear1
    b1 : (1, HIDDEN) f32
    w2 : (HIDDEN, VOCAB) bf16
    b2 : (1, VOCAB) f32
    """
    B = ids.shape[0]
    auto_tb, auto_fuse = _pick_config(B)
    tb = auto_tb if tb is None else tb
    fuse = auto_fuse if fuse is None else fuse
    assert B % tb == 0, "batch must be a multiple of the batch tile"
    grid = (B // tb,)

    flops = 2 * B * (CONTEXT * VOCAB * HIDDEN + HIDDEN * VOCAB)
    transcendentals = B * (VOCAB + 1)             # exp per logit + log per row
    bytes_accessed = int(
        ids.size * ids.dtype.itemsize
        + w1f.size * w1f.dtype.itemsize
        + b1.size * b1.dtype.itemsize
        + w2.size * w2.dtype.itemsize
        + b2.size * b2.dtype.itemsize
        + B * VOCAB * 4
    )

    scratch_shapes = (
        [pltpu.VMEM((tb, CONTEXT * VOCAB), jnp.bfloat16)] if fuse else []
    )

    return pl.pallas_call(
        _make_kernel(tb, fuse),
        out_shape=jax.ShapeDtypeStruct((B, VOCAB), jnp.float32),
        grid=grid,
        in_specs=[
            pl.BlockSpec((tb, CONTEXT), lambda i: (i, 0)),               # ids: tiled over batch
            pl.BlockSpec((CONTEXT * VOCAB, HIDDEN), lambda i: (0, 0)),   # folded W1: VMEM-resident
            pl.BlockSpec((1, HIDDEN), lambda i: (0, 0)),
            pl.BlockSpec((HIDDEN, VOCAB), lambda i: (0, 0)),
            pl.BlockSpec((1, VOCAB), lambda i: (0, 0)),
        ],
        out_specs=pl.BlockSpec((tb, VOCAB), lambda i: (i, 0)),           # lane-dense (128)
        scratch_shapes=scratch_shapes,
        compiler_params=pltpu.CompilerParams(
            dimension_semantics=("parallel",)),                          # megacore / dual-TC shard
        cost_estimate=pl.CostEstimate(
            flops=flops, transcendentals=transcendentals,
            bytes_accessed=bytes_accessed),
    )(ids, w1f, b1, w2, b2)


def reference_forward(ids, w1f_bf, b1, w2_bf, b2):
    """Pure-JAX reference mirroring the kernel's folded bf16-weight / f32-math path."""
    w1f = w1f_bf.astype(jnp.float32).reshape(CONTEXT, VOCAB, HIDDEN)
    x = jnp.zeros((ids.shape[0], HIDDEN), jnp.float32)
    for c in range(CONTEXT):
        x = x + w1f[c][ids[:, c]]                              # == onehot @ W1f[c]
    h = jnp.maximum(x + b1, 0.0)
    h = h.astype(jnp.bfloat16).astype(jnp.float32)             # matches kernel's MXU input cast
    logits = h @ w2_bf.astype(jnp.float32) + b2
    return jax.nn.log_softmax(logits, axis=1)


if __name__ == "__main__":
    key = jax.random.PRNGKey(0)
    k_emb, k_w1, k_b1, k_w2, k_b2, k_ids = jax.random.split(key, 6)

    # Deterministic parameter init (shapes from the module's __init__).
    emb_f32 = jax.random.normal(k_emb, (VOCAB, EMBED), jnp.float32) * 0.1
    w1_f32 = jax.random.normal(k_w1, (CONTEXT * EMBED, HIDDEN), jnp.float32) * 0.05
    b1 = jax.random.normal(k_b1, (1, HIDDEN), jnp.float32) * 0.01
    w2_f32 = jax.random.normal(k_w2, (HIDDEN, VOCAB), jnp.float32) * 0.05
    b2 = jax.random.normal(k_b2, (1, VOCAB), jnp.float32) * 0.01

    # Host-side fold of embedding into linear1 (f32 fold, single bf16 cast).
    w1f = fold_embedding_into_w1(emb_f32, w1_f32)              # (512, 128) bf16
    w2 = w2_f32.astype(jnp.bfloat16)

    ids = jax.random.randint(k_ids, (BATCH, CONTEXT), 0, VOCAB).astype(jnp.int32)
    # Out-of-range ids would silently map to a zero embedding (one-hot matches
    # nothing), unlike torch.nn.Embedding -- validate on the host.
    assert bool(jnp.all((ids >= 0) & (ids < VOCAB))), "token id out of range"

    out = language_modeler_forward(ids, w1f, b1, w2, b2)
    out = jax.block_until_ready(out)

    ref = reference_forward(ids, w1f, b1, w2, b2)
    assert out.shape == (BATCH, VOCAB)
    assert jnp.allclose(out, ref, atol=1e-3, rtol=1e-3), "mismatch vs reference"

    print("KERNEL_OK")
</pallas_src>

<mosaic_0001>
module attributes {stable_mosaic.version = 11 : i64} {
  func.func @lm_kernel(%arg0: i32, %arg1: memref<256x4xi32, #tpu.memory_space<vmem>>, %arg2: memref<512x128xbf16, #tpu.memory_space<vmem>>, %arg3: memref<1x128xf32, #tpu.memory_space<vmem>>, %arg4: memref<128x128xbf16, #tpu.memory_space<vmem>>, %arg5: memref<1x128xf32, #tpu.memory_space<vmem>>, %arg6: memref<256x128xf32, #tpu.memory_space<vmem>>) attributes {dimension_semantics = [#tpu.dimension_semantics<parallel>], iteration_bounds = array<i64: 1>, scalar_prefetch = 0 : i64, scratch_operands = 0 : i64, tpu.core_type = #tpu.core_type<tc>, window_params = [{transform_indices = @transform_0, window_bounds = array<i64: 256, 4>}, {pipeline_mode = #tpu.pipeline_mode<synchronous>, transform_indices = @transform_1, window_bounds = array<i64: 512, 128>}, {pipeline_mode = #tpu.pipeline_mode<synchronous>, transform_indices = @transform_2, window_bounds = array<i64: 1, 128>}, {pipeline_mode = #tpu.pipeline_mode<synchronous>, transform_indices = @transform_3, window_bounds = array<i64: 128, 128>}, {pipeline_mode = #tpu.pipeline_mode<synchronous>, transform_indices = @transform_4, window_bounds = array<i64: 1, 128>}, {transform_indices = @transform_5, window_bounds = array<i64: 256, 128>}]} {
    %c0 = arith.constant 0 : index
    %c0_0 = arith.constant 0 : index
    %0 = vector.load %arg1[%c0, %c0_0] : memref<256x4xi32, #tpu.memory_space<vmem>>, vector<256x4xi32>
    %1 = tpu.iota {dimensions = array<i32: 1>} : vector<256x128xi32>
    %c0_1 = arith.constant 0 : index
    %c0_2 = arith.constant 0 : index
    %2 = vector.load %arg3[%c0_1, %c0_2] : memref<1x128xf32, #tpu.memory_space<vmem>>, vector<1x128xf32>
    %3 = vector.shape_cast %2 : vector<1x128xf32> to vector<1x128xf32>
    %4 = vector.broadcast %3 : vector<1x128xf32> to vector<256x128xf32>
    %5 = vector.extract_strided_slice %0 {offsets = [0, 0], sizes = [256, 1], strides = [1, 1]} : vector<256x4xi32> to vector<256x1xi32>
    %6 = vector.broadcast %5 : vector<256x1xi32> to vector<256x128xi32>
    %7 = arith.cmpi eq, %6, %1 : vector<256x128xi32>
    %8 = arith.extui %7 : vector<256x128xi1> to vector<256x128xi32>
    %9 = arith.sitofp %8 : vector<256x128xi32> to vector<256x128xf32>
    %10 = arith.truncf %9 : vector<256x128xf32> to vector<256x128xbf16>
    %c0_3 = arith.constant 0 : index
    %c0_4 = arith.constant 0 : index
    %11 = vector.load %arg2[%c0_3, %c0_4] : memref<512x128xbf16, #tpu.memory_space<vmem>>, vector<128x128xbf16>
    %cst = arith.constant dense<0.000000e+00> : vector<256x128xf32>
    %12 = tpu.matmul %10, %11, %cst {dimension_numbers = #tpu.dot_dimension_numbers<[1], [0], [0], [1], [0, 0, 1, 1], [], []>} : vector<256x128xbf16>, vector<128x128xbf16>, vector<256x128xf32> -> vector<256x128xf32>
    %13 = arith.addf %4, %12 : vector<256x128xf32>
    %14 = vector.extract_strided_slice %0 {offsets = [0, 1], sizes = [256, 1], strides = [1, 1]} : vector<256x4xi32> to vector<256x1xi32>
    %15 = vector.broadcast %14 : vector<256x1xi32> to vector<256x128xi32>
    %16 = arith.cmpi eq, %15, %1 : vector<256x128xi32>
    %17 = arith.extui %16 : vector<256x128xi1> to vector<256x128xi32>
    %18 = arith.sitofp %17 : vector<256x128xi32> to vector<256x128xf32>
    %19 = arith.truncf %18 : vector<256x128xf32> to vector<256x128xbf16>
    %c128 = arith.constant 128 : index
    %c0_5 = arith.constant 0 : index
    %20 = vector.load %arg2[%c128, %c0_5] : memref<512x128xbf16, #tpu.memory_space<vmem>>, vector<128x128xbf16>
    %cst_6 = arith.constant dense<0.000000e+00> : vector<256x128xf32>
    %21 = tpu.matmul %19, %20, %cst_6 {dimension_numbers = #tpu.dot_dimension_numbers<[1], [0], [0], [1], [0, 0, 1, 1], [], []>} : vector<256x128xbf16>, vector<128x128xbf16>, vector<256x128xf32> -> vector<256x128xf32>
    %22 = arith.addf %13, %21 : vector<256x128xf32>
    %23 = vector.extract_strided_slice %0 {offsets = [0, 2], sizes = [256, 1], strides = [1, 1]} : vector<256x4xi32> to vector<256x1xi32>
    %24 = vector.broadcast %23 : vector<256x1xi32> to vector<256x128xi32>
    %25 = arith.cmpi eq, %24, %1 : vector<256x128xi32>
    %26 = arith.extui %25 : vector<256x128xi1> to vector<256x128xi32>
    %27 = arith.sitofp %26 : vector<256x128xi32> to vector<256x128xf32>
    %28 = arith.truncf %27 : vector<256x128xf32> to vector<256x128xbf16>
    %c256 = arith.constant 256 : index
    %c0_7 = arith.constant 0 : index
    %29 = vector.load %arg2[%c256, %c0_7] : memref<512x128xbf16, #tpu.memory_space<vmem>>, vector<128x128xbf16>
    %cst_8 = arith.constant dense<0.000000e+00> : vector<256x128xf32>
    %30 = tpu.matmul %28, %29, %cst_8 {dimension_numbers = #tpu.dot_dimension_numbers<[1], [0], [0], [1], [0, 0, 1, 1], [], []>} : vector<256x128xbf16>, vector<128x128xbf16>, vector<256x128xf32> -> vector<256x128xf32>
    %31 = arith.addf %22, %30 : vector<256x128xf32>
    %32 = vector.extract_strided_slice %0 {offsets = [0, 3], sizes = [256, 1], strides = [1, 1]} : vector<256x4xi32> to vector<256x1xi32>
    %33 = vector.broadcast %32 : vector<256x1xi32> to vector<256x128xi32>
    %34 = arith.cmpi eq, %33, %1 : vector<256x128xi32>
    %35 = arith.extui %34 : vector<256x128xi1> to vector<256x128xi32>
    %36 = arith.sitofp %35 : vector<256x128xi32> to vector<256x128xf32>
    %37 = arith.truncf %36 : vector<256x128xf32> to vector<256x128xbf16>
    %c384 = arith.constant 384 : index
    %c0_9 = arith.constant 0 : index
    %38 = vector.load %arg2[%c384, %c0_9] : memref<512x128xbf16, #tpu.memory_space<vmem>>, vector<128x128xbf16>
    %cst_10 = arith.constant dense<0.000000e+00> : vector<256x128xf32>
    %39 = tpu.matmul %37, %38, %cst_10 {dimension_numbers = #tpu.dot_dimension_numbers<[1], [0], [0], [1], [0, 0, 1, 1], [], []>} : vector<256x128xbf16>, vector<128x128xbf16>, vector<256x128xf32> -> vector<256x128xf32>
    %40 = arith.addf %31, %39 : vector<256x128xf32>
    %cst_11 = arith.constant 0.000000e+00 : f32
    %41 = vector.broadcast %cst_11 : f32 to vector<256x128xf32>
    %42 = arith.maximumf %40, %41 : vector<256x128xf32>
    %43 = arith.truncf %42 : vector<256x128xf32> to vector<256x128xbf16>
    %c0_12 = arith.constant 0 : index
    %c0_13 = arith.constant 0 : index
    %44 = vector.load %arg4[%c0_12, %c0_13] : memref<128x128xbf16, #tpu.memory_space<vmem>>, vector<128x128xbf16>
    %cst_14 = arith.constant dense<0.000000e+00> : vector<256x128xf32>
    %45 = tpu.matmul %43, %44, %cst_14 {dimension_numbers = #tpu.dot_dimension_numbers<[1], [0], [0], [1], [0, 0, 1, 1], [], []>} : vector<256x128xbf16>, vector<128x128xbf16>, vector<256x128xf32> -> vector<256x128xf32>
    %c0_15 = arith.constant 0 : index
    %c0_16 = arith.constant 0 : index
    %46 = vector.load %arg5[%c0_15, %c0_16] : memref<1x128xf32, #tpu.memory_space<vmem>>, vector<1x128xf32>
    %47 = vector.broadcast %46 : vector<1x128xf32> to vector<256x128xf32>
    %48 = arith.addf %45, %47 : vector<256x128xf32>
    %cst_17 = arith.constant dense<0xFF800000> : vector<256xf32>
    %49 = vector.multi_reduction <maximumf>, %48, %cst_17 [1] : vector<256x128xf32> to vector<256xf32>
    %50 = vector.shape_cast %49 : vector<256xf32> to vector<256x1xf32>
    %51 = vector.broadcast %50 : vector<256x1xf32> to vector<256x128xf32>
    %52 = arith.subf %48, %51 : vector<256x128xf32>
    %53 = math.exp %52 : vector<256x128xf32>
    %cst_18 = arith.constant dense<0.000000e+00> : vector<256xf32>
    %54 = vector.multi_reduction <add>, %53, %cst_18 [1] : vector<256x128xf32> to vector<256xf32>
    %55 = vector.shape_cast %54 : vector<256xf32> to vector<256x1xf32>
    %56 = math.log %55 : vector<256x1xf32>
    %57 = vector.broadcast %56 : vector<256x1xf32> to vector<256x128xf32>
    %58 = arith.subf %52, %57 : vector<256x128xf32>
    %c0_19 = arith.constant 0 : index
    %c0_20 = arith.constant 0 : index
    %59 = vector.load %arg6[%c0_19, %c0_20] : memref<256x128xf32, #tpu.memory_space<vmem>>, vector<256x128xf32>
    tpu.vector_store %arg6[%c0_19, %c0_20], %58 {strides = array<i32>} : memref<256x128xf32, #tpu.memory_space<vmem>>, vector<256x128xf32>,
    return
  }
  func.func @transform_0(%arg0: i32) -> (i32, i32) {
    %c0_i32 = arith.constant 0 : i32
    %c0_i32_0 = arith.constant 0 : i32
    return %arg0, %c0_i32 : i32, i32
  }
  func.func @transform_1(%arg0: i32) -> (i32, i32) {
    %c0_i32 = arith.constant 0 : i32
    %c0_i32_0 = arith.constant 0 : i32
    %c0_i32_1 = arith.constant 0 : i32
    return %c0_i32, %c0_i32_0 : i32, i32
  }
  func.func @transform_2(%arg0: i32) -> (i32, i32) {
    %c0_i32 = arith.constant 0 : i32
    %c0_i32_0 = arith.constant 0 : i32
    %c0_i32_1 = arith.constant 0 : i32
    return %c0_i32, %c0_i32_0 : i32, i32
  }
  func.func @transform_3(%arg0: i32) -> (i32, i32) {
    %c0_i32 = arith.constant 0 : i32
    %c0_i32_0 = arith.constant 0 : i32
    %c0_i32_1 = arith.constant 0 : i32
    return %c0_i32, %c0_i32_0 : i32, i32
  }
  func.func @transform_4(%arg0: i32) -> (i32, i32) {
    %c0_i32 = arith.constant 0 : i32
    %c0_i32_0 = arith.constant 0 : i32
    %c0_i32_1 = arith.constant 0 : i32
    return %c0_i32, %c0_i32_0 : i32, i32
  }
  func.func @transform_5(%arg0: i32) -> (i32, i32) {
    %c0_i32 = arith.constant 0 : i32
    %c0_i32_0 = arith.constant 0 : i32
    return %arg0, %c0_i32 : i32, i32
  }
}

</mosaic_0001>

<llo_original>
// kernel: tpu_custom_call.1
$region0: #{tpu_custom_call.1}
  #allocation0 [shape = 'u32[]', space=smem, size = 0x4, offset = 0x4, fixed_abs, tag = 'smem constant byte address 0x4 - core index']
  #allocation1 [shape = 'u32[72,128]{1,0:T(1,128)}', space=vmem, size = 0x9000, scoped, tag = 'internal scratch']
  %s0 = inlined_call_operand.vmem [shape: s32[256,4], index: 0, kind: input, shape index: {}]
  %s1 = inlined_call_operand.vmem [shape: bf16[512,128], index: 1, kind: input, shape index: {}]
  %s2 = inlined_call_operand.vmem [shape: f32[1,128], index: 2, kind: input, shape index: {}]
  %s3 = inlined_call_operand.hbm [shape: bf16[128,128], index: 3, kind: input, shape index: {}]
  %s4 = inlined_call_operand.vmem [shape: f32[1,128], index: 4, kind: input, shape index: {}]
  %s5 = inlined_call_operand.hbm [shape: f32[256,128], index: 5, kind: output, shape index: {}]
  %s6 = sld [smem:[#allocation0]]
  $region34: #{tpu_custom_call.1} parent=0
    _
  %s8 = ssub.s32 1, %s6
  %s9 = scalar_select 0, %s8, %s6
  $region1: #{tpu_custom_call.1} parent=0
    #allocation2 [shape = 'u8[32768]{0}', space=vmem, size = 0x8000, scoped, tag = 'input window, operand 3, single buffered']
    #allocation3 [shape = 's32[1]{0}', space=sflag, size = 0x4, scoped, tag = 'scoped memory for tpu_custom_call.1']
    #allocation4 [shape = 's32[1]{0}', space=sflag, size = 0x4, scoped, tag = 'scoped memory for tpu_custom_call.1']
    #allocation5 [shape = 'u8[131072]{0}', space=vmem, size = 0x20000, scoped, tag = 'output window, operand 0, single buffered']
    %10 = vsyncpa [#allocation3], 0
    %11 = vsyncpa [#allocation4], 0
    // Predicated region
    $region2: #{tpu_custom_call.1} parent=1 // pred_check
      _
    $region3: #{tpu_custom_call.1} parent=1 // pred_check_branch
      %13 = sbr.rel (0) target = $region5
    $region4: #{tpu_custom_call.1} parent=1 // pred_region
      _
    $region5: #{tpu_custom_call.1} parent=1 // pred_fallthru
      _
    // Predicated region
    $region6: #{tpu_custom_call.1} parent=1 // pred_check
      _
    $region7: #{tpu_custom_call.1} parent=1 // pred_check_branch
      %15 = sbr.rel (0) target = $region9
    $region8: #{tpu_custom_call.1} parent=1 // pred_region
      _
    $region9: #{tpu_custom_call.1} parent=1 // pred_fallthru
      _
    // Predicated region
    $region10: #{tpu_custom_call.1} parent=1 // pred_check
      _
    $region11: #{tpu_custom_call.1} parent=1 // pred_check_branch
      %17 = sbr.rel (0) target = $region13
    $region12: #{tpu_custom_call.1} parent=1 // pred_region
      _
    $region13: #{tpu_custom_call.1} parent=1 // pred_fallthru
      _
    // Predicated region
    $region14: #{tpu_custom_call.1} parent=1 // pred_check
      _
    $region15: #{tpu_custom_call.1} parent=1 // pred_check_branch
      %19 = sbr.rel (0) target = $region17
    $region16: #{tpu_custom_call.1} parent=1 // pred_region
      %21 = vsyncadd [#allocation3], 0
      %s22 = sshll.u32 %s3, 4
      %s23 = int_to_ptr.hbm [resolvable:$true] %s22
      %s24 = sshll.u32 [#allocation2], 4
      %s25 = int_to_ptr.vmem [resolvable:$true] %s24
      %30 = dma.hbm_to_vmem [thread:$0]  %s23, 1024, %s25, [#allocation3], 64, 64, 4
    $region17: #{tpu_custom_call.1} parent=1 // pred_fallthru
      _
    // Predicated region
    $region18: #{tpu_custom_call.1} parent=1 // pred_check
      _
    $region19: #{tpu_custom_call.1} parent=1 // pred_check_branch
      %32 = sbr.rel (0) target = $region21
    $region20: #{tpu_custom_call.1} parent=1 // pred_region
      _
    $region21: #{tpu_custom_call.1} parent=1 // pred_fallthru
      _
    // Predicated region
    $region22: #{tpu_custom_call.1} parent=1 // pred_check
      _
    $region23: #{tpu_custom_call.1} parent=1 // pred_check_branch
      %34 = sbr.rel (0) target = $region25
    $region24: #{tpu_custom_call.1} parent=1 // pred_region
      %36 = dma.done [#allocation3], 1024
    $region25: #{tpu_custom_call.1} parent=1 // pred_fallthru
      _
    %v37 = vld [vmem:[%s0] sm:$0xff]
    %v38 = vld [vmem:[%s0 + $0x8] sm:$0xff]
    %v39 = vld [vmem:[%s0 + $0x10] sm:$0xff]
    %v40 = vld [vmem:[%s0 + $0x18] sm:$0xff]
    %v41 = vld [vmem:[%s0 + $0x20] sm:$0xff]
    %v42 = vld [vmem:[%s0 + $0x28] sm:$0xff]
    %v43 = vld [vmem:[%s0 + $0x30] sm:$0xff]
    %v44 = vld [vmem:[%s0 + $0x38] sm:$0xff]
    %v45 = vld [vmem:[%s0 + $0x40] sm:$0xff]
    %v46 = vld [vmem:[%s0 + $0x48] sm:$0xff]
    %v47 = vld [vmem:[%s0 + $0x50] sm:$0xff]
    %v48 = vld [vmem:[%s0 + $0x58] sm:$0xff]
    %v49 = vld [vmem:[%s0 + $0x60] sm:$0xff]
    %v50 = vld [vmem:[%s0 + $0x68] sm:$0xff]
    %v51 = vld [vmem:[%s0 + $0x70] sm:$0xff]
    %v52 = vld [vmem:[%s0 + $0x78] sm:$0xff]
    %v53 = vld [vmem:[%s0 + $0x80] sm:$0xff]
    %v54 = vld [vmem:[%s0 + $0x88] sm:$0xff]
    %v55 = vld [vmem:[%s0 + $0x90] sm:$0xff]
    %v56 = vld [vmem:[%s0 + $0x98] sm:$0xff]
    %v57 = vld [vmem:[%s0 + $0xa0] sm:$0xff]
    %v58 = vld [vmem:[%s0 + $0xa8] sm:$0xff]
    %v59 = vld [vmem:[%s0 + $0xb0] sm:$0xff]
    %v60 = vld [vmem:[%s0 + $0xb8] sm:$0xff]
    %v61 = vld [vmem:[%s0 + $0xc0] sm:$0xff]
    %v62 = vld [vmem:[%s0 + $0xc8] sm:$0xff]
    %v63 = vld [vmem:[%s0 + $0xd0] sm:$0xff]
    %v64 = vld [vmem:[%s0 + $0xd8] sm:$0xff]
    %v65 = vld [vmem:[%s0 + $0xe0] sm:$0xff]
    %v66 = vld [vmem:[%s0 + $0xe8] sm:$0xff]
    %v67 = vld [vmem:[%s0 + $0xf0] sm:$0xff]
    %v68 = vld [vmem:[%s0 + $0xf8] sm:$0xff]
    %v69 = vlaneseq
    %v70 = vand.u32 %v69, 127
    %v71 = vld [vmem:[%s2] sm:$0x1]
    %v73 = vperm.slane %v71, 0
    %75 = vset.pattern.permute.xlu0 0
    %76 = vperm.xlu0 %75, %v37
    %v77 = vpop.permute.xlu0 %76
    %78 = vset.pattern.permute.xlu0 0
    %79 = vperm.xlu0 %78, %v38
    %v80 = vpop.permute.xlu0 %79
    %81 = vset.pattern.permute.xlu0 0
    %82 = vperm.xlu0 %81, %v39
    %v83 = vpop.permute.xlu0 %82
    %84 = vset.pattern.permute.xlu0 0
    %85 = vperm.xlu0 %84, %v40
    %v86 = vpop.permute.xlu0 %85
    %87 = vset.pattern.permute.xlu0 0
    %88 = vperm.xlu0 %87, %v41
    %v89 = vpop.permute.xlu0 %88
    %90 = vset.pattern.permute.xlu0 0
    %91 = vperm.xlu0 %90, %v42
    %v92 = vpop.permute.xlu0 %91
    %93 = vset.pattern.permute.xlu0 0
    %94 = vperm.xlu0 %93, %v43
    %v95 = vpop.permute.xlu0 %94
    %96 = vset.pattern.permute.xlu0 0
    %97 = vperm.xlu0 %96, %v44
    %v98 = vpop.permute.xlu0 %97
    %99 = vset.pattern.permute.xlu0 0
    %100 = vperm.xlu0 %99, %v45
    %v101 = vpop.permute.xlu0 %100
    %102 = vset.pattern.permute.xlu0 0
    %103 = vperm.xlu0 %102, %v46
    %v104 = vpop.permute.xlu0 %103
    %105 = vset.pattern.permute.xlu0 0
    %106 = vperm.xlu0 %105, %v47
    %v107 = vpop.permute.xlu0 %106
    %108 = vset.pattern.permute.xlu0 0
    %109 = vperm.xlu0 %108, %v48
    %v110 = vpop.permute.xlu0 %109
    %111 = vset.pattern.permute.xlu0 0
    %112 = vperm.xlu0 %111, %v49
    %v113 = vpop.permute.xlu0 %112
    %114 = vset.pattern.permute.xlu0 0
    %115 = vperm.xlu0 %114, %v50
    %v116 = vpop.permute.xlu0 %115
    %117 = vset.pattern.permute.xlu0 0
    %118 = vperm.xlu0 %117, %v51
    %v119 = vpop.permute.xlu0 %118
    %120 = vset.pattern.permute.xlu0 0
    %121 = vperm.xlu0 %120, %v52
    %v122 = vpop.permute.xlu0 %121
    %123 = vset.pattern.permute.xlu0 0
    %124 = vperm.xlu0 %123, %v53
    %v125 = vpop.permute.xlu0 %124
    %126 = vset.pattern.permute.xlu0 0
    %127 = vperm.xlu0 %126, %v54
    %v128 = vpop.permute.xlu0 %127
    %129 = vset.pattern.permute.xlu0 0
    %130 = vperm.xlu0 %129, %v55
    %v131 = vpop.permute.xlu0 %130
    %132 = vset.pattern.permute.xlu0 0
    %133 = vperm.xlu0 %132, %v56
    %v134 = vpop.permute.xlu0 %133
    %135 = vset.pattern.permute.xlu0 0
    %136 = vperm.xlu0 %135, %v57
    %v137 = vpop.permute.xlu0 %136
    %138 = vset.pattern.permute.xlu0 0
    %139 = vperm.xlu0 %138, %v58
    %v140 = vpop.permute.xlu0 %139
    %141 = vset.pattern.permute.xlu0 0
    %142 = vperm.xlu0 %141, %v59
    %v143 = vpop.permute.xlu0 %142
    %144 = vset.pattern.permute.xlu0 0
    %145 = vperm.xlu0 %144, %v60
    %v146 = vpop.permute.xlu0 %145
    %147 = vset.pattern.permute.xlu0 0
    %148 = vperm.xlu0 %147, %v61
    %v149 = vpop.permute.xlu0 %148
    %150 = vset.pattern.permute.xlu0 0
    %151 = vperm.xlu0 %150, %v62
    %v152 = vpop.permute.xlu0 %151
    %153 = vset.pattern.permute.xlu0 0
    %154 = vperm.xlu0 %153, %v63
    %v155 = vpop.permute.xlu0 %154
    %156 = vset.pattern.permute.xlu0 0
    %157 = vperm.xlu0 %156, %v64
    %v158 = vpop.permute.xlu0 %157
    %159 = vset.pattern.permute.xlu0 0
    %160 = vperm.xlu0 %159, %v65
    %v161 = vpop.permute.xlu0 %160
    %162 = vset.pattern.permute.xlu0 0
    %163 = vperm.xlu0 %162, %v66
    %v164 = vpop.permute.xlu0 %163
    %165 = vset.pattern.permute.xlu0 0
    %166 = vperm.xlu0 %165, %v67
    %v167 = vpop.permute.xlu0 %166
    %168 = vset.pattern.permute.xlu0 0
    %169 = vperm.xlu0 %168, %v68
    %v170 = vpop.permute.xlu0 %169
    %vm171 = vcmp.eq.s32.totalorder %v77, %v70
    %vm172 = vcmp.eq.s32.totalorder %v80, %v70
    %vm173 = vcmp.eq.s32.totalorder %v83, %v70
    %vm174 = vcmp.eq.s32.totalorder %v86, %v70
    %vm175 = vcmp.eq.s32.totalorder %v89, %v70
    %vm176 = vcmp.eq.s32.totalorder %v92, %v70
    %vm177 = vcmp.eq.s32.totalorder %v95, %v70
    %vm178 = vcmp.eq.s32.totalorder %v98, %v70
    %vm179 = vcmp.eq.s32.totalorder %v101, %v70
    %vm180 = vcmp.eq.s32.totalorder %v104, %v70
    %vm181 = vcmp.eq.s32.totalorder %v107, %v70
    %vm182 = vcmp.eq.s32.totalorder %v110, %v70
    %vm183 = vcmp.eq.s32.totalorder %v113, %v70
    %vm184 = vcmp.eq.s32.totalorder %v116, %v70
    %vm185 = vcmp.eq.s32.totalorder %v119, %v70
    %vm186 = vcmp.eq.s32.totalorder %v122, %v70
    %vm187 = vcmp.eq.s32.totalorder %v125, %v70
    %vm188 = vcmp.eq.s32.totalorder %v128, %v70
    %vm189 = vcmp.eq.s32.totalorder %v131, %v70
    %vm190 = vcmp.eq.s32.totalorder %v134, %v70
    %vm191 = vcmp.eq.s32.totalorder %v137, %v70
    %vm192 = vcmp.eq.s32.totalorder %v140, %v70
    %vm193 = vcmp.eq.s32.totalorder %v143, %v70
    %vm194 = vcmp.eq.s32.totalorder %v146, %v70
    %vm195 = vcmp.eq.s32.totalorder %v149, %v70
    %vm196 = vcmp.eq.s32.totalorder %v152, %v70
    %vm197 = vcmp.eq.s32.totalorder %v155, %v70
    %vm198 = vcmp.eq.s32.totalorder %v158, %v70
    %vm199 = vcmp.eq.s32.totalorder %v161, %v70
    %vm200 = vcmp.eq.s32.totalorder %v164, %v70
    %vm201 = vcmp.eq.s32.totalorder %v167, %v70
    %vm202 = vcmp.eq.s32.totalorder %v170, %v70
    %v203 = vsel %vm171, 1, 0
    %v204 = vsel %vm172, 1, 0
    %v205 = vsel %vm173, 1, 0
    %v206 = vsel %vm174, 1, 0
    %v207 = vsel %vm175, 1, 0
    %v208 = vsel %vm176, 1, 0
    %v209 = vsel %vm177, 1, 0
    %v210 = vsel %vm178, 1, 0
    %v211 = vsel %vm179, 1, 0
    %v212 = vsel %vm180, 1, 0
    %v213 = vsel %vm181, 1, 0
    %v214 = vsel %vm182, 1, 0
    %v215 = vsel %vm183, 1, 0
    %v216 = vsel %vm184, 1, 0
    %v217 = vsel %vm185, 1, 0
    %v218 = vsel %vm186, 1, 0
    %v219 = vsel %vm187, 1, 0
    %v220 = vsel %vm188, 1, 0
    %v221 = vsel %vm189, 1, 0
    %v222 = vsel %vm190, 1, 0
    %v223 = vsel %vm191, 1, 0
    %v224 = vsel %vm192, 1, 0
    %v225 = vsel %vm193, 1, 0
    %v226 = vsel %vm194, 1, 0
    %v227 = vsel %vm195, 1, 0
    %v228 = vsel %vm196, 1, 0
    %v229 = vsel %vm197, 1, 0
    %v230 = vsel %vm198, 1, 0
    %v231 = vsel %vm199, 1, 0
    %v232 = vsel %vm200, 1, 0
    %v233 = vsel %vm201, 1, 0
    %v234 = vsel %vm202, 1, 0
    %v235 = vcvt.s32.f32 %v203
    %v236 = vcvt.s32.f32 %v204
    %v237 = vcvt.s32.f32 %v205
    %v238 = vcvt.s32.f32 %v206
    %v239 = vcvt.s32.f32 %v207
    %v240 = vcvt.s32.f32 %v208
    %v241 = vcvt.s32.f32 %v209
    %v242 = vcvt.s32.f32 %v210
    %v243 = vcvt.s32.f32 %v211
    %v244 = vcvt.s32.f32 %v212
    %v245 = vcvt.s32.f32 %v213
    %v246 = vcvt.s32.f32 %v214
    %v247 = vcvt.s32.f32 %v215
    %v248 = vcvt.s32.f32 %v216
    %v249 = vcvt.s32.f32 %v217
    %v250 = vcvt.s32.f32 %v218
    %v251 = vcvt.s32.f32 %v219
    %v252 = vcvt.s32.f32 %v220
    %v253 = vcvt.s32.f32 %v221
    %v254 = vcvt.s32.f32 %v222
    %v255 = vcvt.s32.f32 %v223
    %v256 = vcvt.s32.f32 %v224
    %v257 = vcvt.s32.f32 %v225
    %v258 = vcvt.s32.f32 %v226
    %v259 = vcvt.s32.f32 %v227
    %v260 = vcvt.s32.f32 %v228
    %v261 = vcvt.s32.f32 %v229
    %v262 = vcvt.s32.f32 %v230
    %v263 = vcvt.s32.f32 %v231
    %v264 = vcvt.s32.f32 %v232
    %v265 = vcvt.s32.f32 %v233
    %v266 = vcvt.s32.f32 %v234
    %v267 = vpack.c.bf16 %v236, %v235
    %v268 = vpack.c.bf16 %v238, %v237
    %v269 = vpack.c.bf16 %v240, %v239
    %v270 = vpack.c.bf16 %v242, %v241
    %v271 = vpack.c.bf16 %v244, %v243
    %v272 = vpack.c.bf16 %v246, %v245
    %v273 = vpack.c.bf16 %v248, %v247
    %v274 = vpack.c.bf16 %v250, %v249
    %v275 = vpack.c.bf16 %v252, %v251
    %v276 = vpack.c.bf16 %v254, %v253
    %v277 = vpack.c.bf16 %v256, %v255
    %v278 = vpack.c.bf16 %v258, %v257
    %v279 = vpack.c.bf16 %v260, %v259
    %v280 = vpack.c.bf16 %v262, %v261
    %v281 = vpack.c.bf16 %v264, %v263
    %v282 = vpack.c.bf16 %v266, %v265
    %v283 = vld [vmem:[%s1] sm:$0xf]
    %v284 = vld [vmem:[%s1 + $0x4] sm:$0xf]
    %v285 = vld [vmem:[%s1 + $0x8] sm:$0xf]
    %v286 = vld [vmem:[%s1 + $0xc] sm:$0xf]
    %v287 = vld [vmem:[%s1 + $0x10] sm:$0xf]
    %v288 = vld [vmem:[%s1 + $0x14] sm:$0xf]
    %v289 = vld [vmem:[%s1 + $0x18] sm:$0xf]
    %v290 = vld [vmem:[%s1 + $0x1c] sm:$0xf]
    %v291 = vld [vmem:[%s1 + $0x20] sm:$0xf]
    %v292 = vld [vmem:[%s1 + $0x24] sm:$0xf]
    %v293 = vld [vmem:[%s1 + $0x28] sm:$0xf]
    %v294 = vld [vmem:[%s1 + $0x2c] sm:$0xf]
    %v295 = vld [vmem:[%s1 + $0x30] sm:$0xf]
    %v296 = vld [vmem:[%s1 + $0x34] sm:$0xf]
    %v297 = vld [vmem:[%s1 + $0x38] sm:$0xf]
    %v298 = vld [vmem:[%s1 + $0x3c] sm:$0xf]
    %v315 = vunpack.c.l.b16 %v283
    %v316 = vunpack.c.l.b16 %v284
    %v317 = vunpack.c.l.b16 %v285
    %v318 = vunpack.c.l.b16 %v286
    %v319 = vunpack.c.l.b16 %v287
    %v320 = vunpack.c.l.b16 %v288
    %v321 = vunpack.c.l.b16 %v289
    %v322 = vunpack.c.l.b16 %v290
    %v323 = vunpack.c.l.b16 %v291
    %v324 = vunpack.c.l.b16 %v292
    %v325 = vunpack.c.l.b16 %v293
    %v326 = vunpack.c.l.b16 %v294
    %v327 = vunpack.c.l.b16 %v295
    %v328 = vunpack.c.l.b16 %v296
    %v329 = vunpack.c.l.b16 %v297
    %v330 = vunpack.c.l.b16 %v298
    %v331 = vpack.c.b16 %v316, %v315
    %v332 = vpack.c.b16 %v318, %v317
    %v333 = vpack.c.b16 %v320, %v319
    %v334 = vpack.c.b16 %v322, %v321
    %v335 = vpack.c.b16 %v324, %v323
    %v336 = vpack.c.b16 %v326, %v325
    %v337 = vpack.c.b16 %v328, %v327
    %v338 = vpack.c.b16 %v330, %v329
    %347 = vmatpush.bf16.msra.mxu0 %v338
    %348 = vmatpush.bf16.msra.mxu0 %v337
    %349 = vmatpush.bf16.msra.mxu0 %v336
    %350 = vmatpush.bf16.msra.mxu0 %v335
    %351 = vmatpush.bf16.msra.mxu0 %v334
    %352 = vmatpush.bf16.msra.mxu0 %v333
    %353 = vmatpush.bf16.msra.mxu0 %v332
    %354 = vmatpush.bf16.msra.mxu0 %v331
    %355 = vmatmul.bf16.gmra.mxu0 %v267
    %v356 = vpop.f32.mrf.mxu0
    %v357 = vadd.f32 0.0, %v356
    %v358 = vpop.f32.mrf.mxu0
    %v359 = vadd.f32 0.0, %v358
    %360 = vmatmul.bf16.gmra.mxu0 %v268
    %v361 = vpop.f32.mrf.mxu0
    %v362 = vadd.f32 0.0, %v361
    %v363 = vpop.f32.mrf.mxu0
    %v364 = vadd.f32 0.0, %v363
    %365 = vmatmul.bf16.gmra.mxu0 %v269
    %v366 = vpop.f32.mrf.mxu0
    %v367 = vadd.f32 0.0, %v366
    %v368 = vpop.f32.mrf.mxu0
    %v369 = vadd.f32 0.0, %v368
    %370 = vmatmul.bf16.gmra.mxu0 %v270
    %v371 = vpop.f32.mrf.mxu0
    %v372 = vadd.f32 0.0, %v371
    %v373 = vpop.f32.mrf.mxu0
    %v374 = vadd.f32 0.0, %v373
    %375 = vmatmul.bf16.gmra.mxu0 %v271
    %v376 = vpop.f32.mrf.mxu0
    %v377 = vadd.f32 0.0, %v376
    %v378 = vpop.f32.mrf.mxu0
    %v379 = vadd.f32 0.0, %v378
    %380 = vmatmul.bf16.gmra.mxu0 %v272
    %v381 = vpop.f32.mrf.mxu0
    %v382 = vadd.f32 0.0, %v381
    %v383 = vpop.f32.mrf.mxu0
    %v384 = vadd.f32 0.0, %v383
    %385 = vmatmul.bf16.gmra.mxu0 %v273
    %v386 = vpop.f32.mrf.mxu0
    %v387 = vadd.f32 0.0, %v386
    %v388 = vpop.f32.mrf.mxu0
    %v389 = vadd.f32 0.0, %v388
    %390 = vmatmul.bf16.gmra.mxu0 %v274
    %v391 = vpop.f32.mrf.mxu0
    %v392 = vadd.f32 0.0, %v391
    %v393 = vpop.f32.mrf.mxu0
    %v394 = vadd.f32 0.0, %v393
    %395 = vmatmul.bf16.gmra.mxu0 %v275
    %v396 = vpop.f32.mrf.mxu0
    %v397 = vadd.f32 0.0, %v396
    %v398 = vpop.f32.mrf.mxu0
    %v399 = vadd.f32 0.0, %v398
    %400 = vmatmul.bf16.gmra.mxu0 %v276
    %v401 = vpop.f32.mrf.mxu0
    %v402 = vadd.f32 0.0, %v401
    %v403 = vpop.f32.mrf.mxu0
    %v404 = vadd.f32 0.0, %v403
    %405 = vmatmul.bf16.gmra.mxu0 %v277
    %v406 = vpop.f32.mrf.mxu0
    %v407 = vadd.f32 0.0, %v406
    %v408 = vpop.f32.mrf.mxu0
    %v409 = vadd.f32 0.0, %v408
    %410 = vmatmul.bf16.gmra.mxu0 %v278
    %v411 = vpop.f32.mrf.mxu0
    %v412 = vadd.f32 0.0, %v411
    %v413 = vpop.f32.mrf.mxu0
    %v414 = vadd.f32 0.0, %v413
    %415 = vmatmul.bf16.gmra.mxu0 %v279
    %v416 = vpop.f32.mrf.mxu0
    %v417 = vadd.f32 0.0, %v416
    %v418 = vpop.f32.mrf.mxu0
    %v419 = vadd.f32 0.0, %v418
    %420 = vmatmul.bf16.gmra.mxu0 %v280
    %v421 = vpop.f32.mrf.mxu0
    %v422 = vadd.f32 0.0, %v421
    %v423 = vpop.f32.mrf.mxu0
    %v424 = vadd.f32 0.0, %v423
    %425 = vmatmul.bf16.gmra.mxu0 %v281
    %v426 = vpop.f32.mrf.mxu0
    %v427 = vadd.f32 0.0, %v426
    %v428 = vpop.f32.mrf.mxu0
    %v429 = vadd.f32 0.0, %v428
    %430 = vmatmul.bf16.gmra.mxu0 %v282
    %v431 = vpop.f32.mrf.mxu0
    %v432 = vadd.f32 0.0, %v431
    %v433 = vpop.f32.mrf.mxu0
    %v434 = vadd.f32 0.0, %v433
    %435 = vdwg.mxu0
    %v436 = vadd.f32 %v73, %v357
    %v437 = vadd.f32 %v73, %v359
    %v438 = vadd.f32 %v73, %v362
    %v439 = vadd.f32 %v73, %v364
    %v440 = vadd.f32 %v73, %v367
    %v441 = vadd.f32 %v73, %v369
    %v442 = vadd.f32 %v73, %v372
    %v443 = vadd.f32 %v73, %v374
    %v444 = vadd.f32 %v73, %v377
    %v445 = vadd.f32 %v73, %v379
    %v446 = vadd.f32 %v73, %v382
    %v447 = vadd.f32 %v73, %v384
    %v448 = vadd.f32 %v73, %v387
    %v449 = vadd.f32 %v73, %v389
    %v450 = vadd.f32 %v73, %v392
    %v451 = vadd.f32 %v73, %v394
    %v452 = vadd.f32 %v73, %v397
    %v453 = vadd.f32 %v73, %v399
    %v454 = vadd.f32 %v73, %v402
    %v455 = vadd.f32 %v73, %v404
    %v456 = vadd.f32 %v73, %v407
    %v457 = vadd.f32 %v73, %v409
    %v458 = vadd.f32 %v73, %v412
    %v459 = vadd.f32 %v73, %v414
    %v460 = vadd.f32 %v73, %v417
    %v461 = vadd.f32 %v73, %v419
    %v462 = vadd.f32 %v73, %v422
    %v463 = vadd.f32 %v73, %v424
    %v464 = vadd.f32 %v73, %v427
    %v465 = vadd.f32 %v73, %v429
    %v466 = vadd.f32 %v73, %v432
    %v467 = vadd.f32 %v73, %v434
    %468 = vset.pattern.permute.xlu0 1
    %469 = vperm.xlu0 %468, %v37
    %v470 = vpop.permute.xlu0 %469
    %471 = vset.pattern.permute.xlu0 1
    %472 = vperm.xlu0 %471, %v38
    %v473 = vpop.permute.xlu0 %472
    %474 = vset.pattern.permute.xlu0 1
    %475 = vperm.xlu0 %474, %v39
    %v476 = vpop.permute.xlu0 %475
    %477 = vset.pattern.permute.xlu0 1
    %478 = vperm.xlu0 %477, %v40
    %v479 = vpop.permute.xlu0 %478
    %480 = vset.pattern.permute.xlu0 1
    %481 = vperm.xlu0 %480, %v41
    %v482 = vpop.permute.xlu0 %481
    %483 = vset.pattern.permute.xlu0 1
    %484 = vperm.xlu0 %483, %v42
    %v485 = vpop.permute.xlu0 %484
    %486 = vset.pattern.permute.xlu0 1
    %487 = vperm.xlu0 %486, %v43
    %v488 = vpop.permute.xlu0 %487
    %489 = vset.pattern.permute.xlu0 1
    %490 = vperm.xlu0 %489, %v44
    %v491 = vpop.permute.xlu0 %490
    %492 = vset.pattern.permute.xlu0 1
    %493 = vperm.xlu0 %492, %v45
    %v494 = vpop.permute.xlu0 %493
    %495 = vset.pattern.permute.xlu0 1
    %496 = vperm.xlu0 %495, %v46
    %v497 = vpop.permute.xlu0 %496
    %498 = vset.pattern.permute.xlu0 1
    %499 = vperm.xlu0 %498, %v47
    %v500 = vpop.permute.xlu0 %499
    %501 = vset.pattern.permute.xlu0 1
    %502 = vperm.xlu0 %501, %v48
    %v503 = vpop.permute.xlu0 %502
    %504 = vset.pattern.permute.xlu0 1
    %505 = vperm.xlu0 %504, %v49
    %v506 = vpop.permute.xlu0 %505
    %507 = vset.pattern.permute.xlu0 1
    %508 = vperm.xlu0 %507, %v50
    %v509 = vpop.permute.xlu0 %508
    %510 = vset.pattern.permute.xlu0 1
    %511 = vperm.xlu0 %510, %v51
    %v512 = vpop.permute.xlu0 %511
    %513 = vset.pattern.permute.xlu0 1
    %514 = vperm.xlu0 %513, %v52
    %v515 = vpop.permute.xlu0 %514
    %516 = vset.pattern.permute.xlu0 1
    %517 = vperm.xlu0 %516, %v53
    %v518 = vpop.permute.xlu0 %517
    %519 = vset.pattern.permute.xlu0 1
    %520 = vperm.xlu0 %519, %v54
    %v521 = vpop.permute.xlu0 %520
    %522 = vset.pattern.permute.xlu0 1
    %523 = vperm.xlu0 %522, %v55
    %v524 = vpop.permute.xlu0 %523
    %525 = vset.pattern.permute.xlu0 1
    %526 = vperm.xlu0 %525, %v56
    %v527 = vpop.permute.xlu0 %526
    %528 = vset.pattern.permute.xlu0 1
    %529 = vperm.xlu0 %528, %v57
    %v530 = vpop.permute.xlu0 %529
    %531 = vset.pattern.permute.xlu0 1
    %532 = vperm.xlu0 %531, %v58
    %v533 = vpop.permute.xlu0 %532
    %534 = vset.pattern.permute.xlu0 1
    %535 = vperm.xlu0 %534, %v59
    %v536 = vpop.permute.xlu0 %535
    %537 = vset.pattern.permute.xlu0 1
    %538 = vperm.xlu0 %537, %v60
    %v539 = vpop.permute.xlu0 %538
    %540 = vset.pattern.permute.xlu0 1
    %541 = vperm.xlu0 %540, %v61
    %v542 = vpop.permute.xlu0 %541
    %543 = vset.pattern.permute.xlu0 1
    %544 = vperm.xlu0 %543, %v62
    %v545 = vpop.permute.xlu0 %544
    %546 = vset.pattern.permute.xlu0 1
    %547 = vperm.xlu0 %546, %v63
    %v548 = vpop.permute.xlu0 %547
    %549 = vset.pattern.permute.xlu0 1
    %550 = vperm.xlu0 %549, %v64
    %v551 = vpop.permute.xlu0 %550
    %552 = vset.pattern.permute.xlu0 1
    %553 = vperm.xlu0 %552, %v65
    %v554 = vpop.permute.xlu0 %553
    %555 = vset.pattern.permute.xlu0 1
    %556 = vperm.xlu0 %555, %v66
    %v557 = vpop.permute.xlu0 %556
    %558 = vset.pattern.permute.xlu0 1
    %559 = vperm.xlu0 %558, %v67
    %v560 = vpop.permute.xlu0 %559
    %561 = vset.pattern.permute.xlu0 1
    %562 = vperm.xlu0 %561, %v68
    %v563 = vpop.permute.xlu0 %562
    %vm564 = vcmp.eq.s32.totalorder %v470, %v70
    %vm565 = vcmp.eq.s32.totalorder %v473, %v70
    %vm566 = vcmp.eq.s32.totalorder %v476, %v70
    %vm567 = vcmp.eq.s32.totalorder %v479, %v70
    %vm568 = vcmp.eq.s32.totalorder %v482, %v70
    %vm569 = vcmp.eq.s32.totalorder %v485, %v70
    %vm570 = vcmp.eq.s32.totalorder %v488, %v70
    %vm571 = vcmp.eq.s32.totalorder %v491, %v70
    %vm572 = vcmp.eq.s32.totalorder %v494, %v70
    %vm573 = vcmp.eq.s32.totalorder %v497, %v70
    %vm574 = vcmp.eq.s32.totalorder %v500, %v70
    %vm575 = vcmp.eq.s32.totalorder %v503, %v70
    %vm576 = vcmp.eq.s32.totalorder %v506, %v70
    %vm577 = vcmp.eq.s32.totalorder %v509, %v70
    %vm578 = vcmp.eq.s32.totalorder %v512, %v70
    %vm579 = vcmp.eq.s32.totalorder %v515, %v70
    %vm580 = vcmp.eq.s32.totalorder %v518, %v70
    %vm581 = vcmp.eq.s32.totalorder %v521, %v70
    %vm582 = vcmp.eq.s32.totalorder %v524, %v70
    %vm583 = vcmp.eq.s32.totalorder %v527, %v70
    %vm584 = vcmp.eq.s32.totalorder %v530, %v70
    %vm585 = vcmp.eq.s32.totalorder %v533, %v70
    %vm586 = vcmp.eq.s32.totalorder %v536, %v70
    %vm587 = vcmp.eq.s32.totalorder %v539, %v70
    %vm588 = vcmp.eq.s32.totalorder %v542, %v70
    %vm589 = vcmp.eq.s32.totalorder %v545, %v70
    %vm590 = vcmp.eq.s32.totalorder %v548, %v70
    %vm591 = vcmp.eq.s32.totalorder %v551, %v70
    %vm592 = vcmp.eq.s32.totalorder %v554, %v70
    %vm593 = vcmp.eq.s32.totalorder %v557, %v70
    %vm594 = vcmp.eq.s32.totalorder %v560, %v70
    %vm595 = vcmp.eq.s32.totalorder %v563, %v70
    %v596 = vsel %vm564, 1, 0
    %v597 = vsel %vm565, 1, 0
    %v598 = vsel %vm566, 1, 0
    %v599 = vsel %vm567, 1, 0
    %v600 = vsel %vm568, 1, 0
    %v601 = vsel %vm569, 1, 0
    %v602 = vsel %vm570, 1, 0
    %v603 = vsel %vm571, 1, 0
    %v604 = vsel %vm572, 1, 0
    %v605 = vsel %vm573, 1, 0
    %v606 = vsel %vm574, 1, 0
    %v607 = vsel %vm575, 1, 0
    %v608 = vsel %vm576, 1, 0
    %v609 = vsel %vm577, 1, 0
    %v610 = vsel %vm578, 1, 0
    %v611 = vsel %vm579, 1, 0
    %v612 = vsel %vm580, 1, 0
    %v613 = vsel %vm581, 1, 0
    %v614 = vsel %vm582, 1, 0
    %v615 = vsel %vm583, 1, 0
    %v616 = vsel %vm584, 1, 0
    %v617 = vsel %vm585, 1, 0
    %v618 = vsel %vm586, 1, 0
    %v619 = vsel %vm587, 1, 0
    %v620 = vsel %vm588, 1, 0
    %v621 = vsel %vm589, 1, 0
    %v622 = vsel %vm590, 1, 0
    %v623 = vsel %vm591, 1, 0
    %v624 = vsel %vm592, 1, 0
    %v625 = vsel %vm593, 1, 0
    %v626 = vsel %vm594, 1, 0
    %v627 = vsel %vm595, 1, 0
    %v628 = vcvt.s32.f32 %v596
    %v629 = vcvt.s32.f32 %v597
    %v630 = vcvt.s32.f32 %v598
    %v631 = vcvt.s32.f32 %v599
    %v632 = vcvt.s32.f32 %v600
    %v633 = vcvt.s32.f32 %v601
    %v634 = vcvt.s32.f32 %v602
    %v635 = vcvt.s32.f32 %v603
    %v636 = vcvt.s32.f32 %v604
    %v637 = vcvt.s32.f32 %v605
    %v638 = vcvt.s32.f32 %v606
    %v639 = vcvt.s32.f32 %v607
    %v640 = vcvt.s32.f32 %v608
    %v641 = vcvt.s32.f32 %v609
    %v642 = vcvt.s32.f32 %v610
    %v643 = vcvt.s32.f32 %v611
    %v644 = vcvt.s32.f32 %v612
    %v645 = vcvt.s32.f32 %v613
    %v646 = vcvt.s32.f32 %v614
    %v647 = vcvt.s32.f32 %v615
    %v648 = vcvt.s32.f32 %v616
    %v649 = vcvt.s32.f32 %v617
    %v650 = vcvt.s32.f32 %v618
    %v651 = vcvt.s32.f32 %v619
    %v652 = vcvt.s32.f32 %v620
    %v653 = vcvt.s32.f32 %v621
    %v654 = vcvt.s32.f32 %v622
    %v655 = vcvt.s32.f32 %v623
    %v656 = vcvt.s32.f32 %v624
    %v657 = vcvt.s32.f32 %v625
    %v658 = vcvt.s32.f32 %v626
    %v659 = vcvt.s32.f32 %v627
    %v660 = vpack.c.bf16 %v629, %v628
    %v661 = vpack.c.bf16 %v631, %v630
    %v662 = vpack.c.bf16 %v633, %v632
    %v663 = vpack.c.bf16 %v635, %v634
    %v664 = vpack.c.bf16 %v637, %v636
    %v665 = vpack.c.bf16 %v639, %v638
    %v666 = vpack.c.bf16 %v641, %v640
    %v667 = vpack.c.bf16 %v643, %v642
    %v668 = vpack.c.bf16 %v645, %v644
    %v669 = vpack.c.bf16 %v647, %v646
    %v670 = vpack.c.bf16 %v649, %v648
    %v671 = vpack.c.bf16 %v651, %v650
    %v672 = vpack.c.bf16 %v653, %v652
    %v673 = vpack.c.bf16 %v655, %v654
    %v674 = vpack.c.bf16 %v657, %v656
    %v675 = vpack.c.bf16 %v659, %v658
    %v676 = vld [vmem:[%s1 + $0x40] sm:$0xf]
    %v677 = vld [vmem:[%s1 + $0x44] sm:$0xf]
    %v678 = vld [vmem:[%s1 + $0x48] sm:$0xf]
    %v679 = vld [vmem:[%s1 + $0x4c] sm:$0xf]
    %v680 = vld [vmem:[%s1 + $0x50] sm:$0xf]
    %v681 = vld [vmem:[%s1 + $0x54] sm:$0xf]
    %v682 = vld [vmem:[%s1 + $0x58] sm:$0xf]
    %v683 = vld [vmem:[%s1 + $0x5c] sm:$0xf]
    %v684 = vld [vmem:[%s1 + $0x60] sm:$0xf]
    %v685 = vld [vmem:[%s1 + $0x64] sm:$0xf]
    %v686 = vld [vmem:[%s1 + $0x68] sm:$0xf]
    %v687 = vld [vmem:[%s1 + $0x6c] sm:$0xf]
    %v688 = vld [vmem:[%s1 + $0x70] sm:$0xf]
    %v689 = vld [vmem:[%s1 + $0x74] sm:$0xf]
    %v690 = vld [vmem:[%s1 + $0x78] sm:$0xf]
    %v691 = vld [vmem:[%s1 + $0x7c] sm:$0xf]
    %v708 = vunpack.c.l.b16 %v676
    %v709 = vunpack.c.l.b16 %v677
    %v710 = vunpack.c.l.b16 %v678
    %v711 = vunpack.c.l.b16 %v679
    %v712 = vunpack.c.l.b16 %v680
    %v713 = vunpack.c.l.b16 %v681
    %v714 = vunpack.c.l.b16 %v682
    %v715 = vunpack.c.l.b16 %v683
    %v716 = vunpack.c.l.b16 %v684
    %v717 = vunpack.c.l.b16 %v685
    %v718 = vunpack.c.l.b16 %v686
    %v719 = vunpack.c.l.b16 %v687
    %v720 = vunpack.c.l.b16 %v688
    %v721 = vunpack.c.l.b16 %v689
    %v722 = vunpack.c.l.b16 %v690
    %v723 = vunpack.c.l.b16 %v691
    %v724 = vpack.c.b16 %v709, %v708
    %v725 = vpack.c.b16 %v711, %v710
    %v726 = vpack.c.b16 %v713, %v712
    %v727 = vpack.c.b16 %v715, %v714
    %v728 = vpack.c.b16 %v717, %v716
    %v729 = vpack.c.b16 %v719, %v718
    %v730 = vpack.c.b16 %v721, %v720
    %v731 = vpack.c.b16 %v723, %v722
    %740 = vmatpush.bf16.msra.mxu0 %v731
    %741 = vmatpush.bf16.msra.mxu0 %v730
    %742 = vmatpush.bf16.msra.mxu0 %v729
    %743 = vmatpush.bf16.msra.mxu0 %v728
    %744 = vmatpush.bf16.msra.mxu0 %v727
    %745 = vmatpush.bf16.msra.mxu0 %v726
    %746 = vmatpush.bf16.msra.mxu0 %v725
    %747 = vmatpush.bf16.msra.mxu0 %v724
    %748 = vmatmul.bf16.gmra.mxu0 %v660
    %v749 = vpop.f32.mrf.mxu0
    %v750 = vadd.f32 0.0, %v749
    %v751 = vpop.f32.mrf.mxu0
    %v752 = vadd.f32 0.0, %v751
    %753 = vmatmul.bf16.gmra.mxu0 %v661
    %v754 = vpop.f32.mrf.mxu0
    %v755 = vadd.f32 0.0, %v754
    %v756 = vpop.f32.mrf.mxu0
    %v757 = vadd.f32 0.0, %v756
    %758 = vmatmul.bf16.gmra.mxu0 %v662
    %v759 = vpop.f32.mrf.mxu0
    %v760 = vadd.f32 0.0, %v759
    %v761 = vpop.f32.mrf.mxu0
    %v762 = vadd.f32 0.0, %v761
    %763 = vmatmul.bf16.gmra.mxu0 %v663
    %v764 = vpop.f32.mrf.mxu0
    %v765 = vadd.f32 0.0, %v764
    %v766 = vpop.f32.mrf.mxu0
    %v767 = vadd.f32 0.0, %v766
    %768 = vmatmul.bf16.gmra.mxu0 %v664
    %v769 = vpop.f32.mrf.mxu0
    %v770 = vadd.f32 0.0, %v769
    %v771 = vpop.f32.mrf.mxu0
    %v772 = vadd.f32 0.0, %v771
    %773 = vmatmul.bf16.gmra.mxu0 %v665
    %v774 = vpop.f32.mrf.mxu0
    %v775 = vadd.f32 0.0, %v774
    %v776 = vpop.f32.mrf.mxu0
    %v777 = vadd.f32 0.0, %v776
    %778 = vmatmul.bf16.gmra.mxu0 %v666
    %v779 = vpop.f32.mrf.mxu0
    %v780 = vadd.f32 0.0, %v779
    %v781 = vpop.f32.mrf.mxu0
    %v782 = vadd.f32 0.0, %v781
    %783 = vmatmul.bf16.gmra.mxu0 %v667
    %v784 = vpop.f32.mrf.mxu0
    %v785 = vadd.f32 0.0, %v784
    %v786 = vpop.f32.mrf.mxu0
    %v787 = vadd.f32 0.0, %v786
    %788 = vmatmul.bf16.gmra.mxu0 %v668
    %v789 = vpop.f32.mrf.mxu0
    %v790 = vadd.f32 0.0, %v789
    %v791 = vpop.f32.mrf.mxu0
    %v792 = vadd.f32 0.0, %v791
    %793 = vmatmul.bf16.gmra.mxu0 %v669
    %v794 = vpop.f32.mrf.mxu0
    %v795 = vadd.f32 0.0, %v794
    %v796 = vpop.f32.mrf.mxu0
    %v797 = vadd.f32 0.0, %v796
    %798 = vmatmul.bf16.gmra.mxu0 %v670
    %v799 = vpop.f32.mrf.mxu0
    %v800 = vadd.f32 0.0, %v799
    %v801 = vpop.f32.mrf.mxu0
    %v802 = vadd.f32 0.0, %v801
    %803 = vmatmul.bf16.gmra.mxu0 %v671
    %v804 = vpop.f32.mrf.mxu0
    %v805 = vadd.f32 0.0, %v804
    %v806 = vpop.f32.mrf.mxu0
    %v807 = vadd.f32 0.0, %v806
    %808 = vmatmul.bf16.gmra.mxu0 %v672
    %v809 = vpop.f32.mrf.mxu0
    %v810 = vadd.f32 0.0, %v809
    %v811 = vpop.f32.mrf.mxu0
    %v812 = vadd.f32 0.0, %v811
    %813 = vmatmul.bf16.gmra.mxu0 %v673
    %v814 = vpop.f32.mrf.mxu0
    %v815 = vadd.f32 0.0, %v814
    %v816 = vpop.f32.mrf.mxu0
    %v817 = vadd.f32 0.0, %v816
    %818 = vmatmul.bf16.gmra.mxu0 %v674
    %v819 = vpop.f32.mrf.mxu0
    %v820 = vadd.f32 0.0, %v819
    %v821 = vpop.f32.mrf.mxu0
    %v822 = vadd.f32 0.0, %v821
    %823 = vmatmul.bf16.gmra.mxu0 %v675
    %v824 = vpop.f32.mrf.mxu0
    %v825 = vadd.f32 0.0, %v824
    %v826 = vpop.f32.mrf.mxu0
    %v827 = vadd.f32 0.0, %v826
    %828 = vdwg.mxu0
    %v829 = vadd.f32 %v436, %v750
    %v830 = vadd.f32 %v437, %v752
    %v831 = vadd.f32 %v438, %v755
    %v832 = vadd.f32 %v439, %v757
    %v833 = vadd.f32 %v440, %v760
    %v834 = vadd.f32 %v441, %v762
    %v835 = vadd.f32 %v442, %v765
    %v836 = vadd.f32 %v443, %v767
    %v837 = vadd.f32 %v444, %v770
    %v838 = vadd.f32 %v445, %v772
    %v839 = vadd.f32 %v446, %v775
    %v840 = vadd.f32 %v447, %v777
    %v841 = vadd.f32 %v448, %v780
    %v842 = vadd.f32 %v449, %v782
    %v843 = vadd.f32 %v450, %v785
    %v844 = vadd.f32 %v451, %v787
    %v845 = vadd.f32 %v452, %v790
    %v846 = vadd.f32 %v453, %v792
    %v847 = vadd.f32 %v454, %v795
    %v848 = vadd.f32 %v455, %v797
    %v849 = vadd.f32 %v456, %v800
    %v850 = vadd.f32 %v457, %v802
    %v851 = vadd.f32 %v458, %v805
    %v852 = vadd.f32 %v459, %v807
    %v853 = vadd.f32 %v460, %v810
    %v854 = vadd.f32 %v461, %v812
    %v855 = vadd.f32 %v462, %v815
    %v856 = vadd.f32 %v463, %v817
    %v857 = vadd.f32 %v464, %v820
    %v858 = vadd.f32 %v465, %v822
    %v859 = vadd.f32 %v466, %v825
    %v860 = vadd.f32 %v467, %v827
    %861 = vset.pattern.permute.xlu0 2
    %862 = vperm.xlu0 %861, %v37
    %v863 = vpop.permute.xlu0 %862
    %864 = vset.pattern.permute.xlu0 2
    %865 = vperm.xlu0 %864, %v38
    %v866 = vpop.permute.xlu0 %865
    %867 = vset.pattern.permute.xlu0 2
    %868 = vperm.xlu0 %867, %v39
    %v869 = vpop.permute.xlu0 %868
    %870 = vset.pattern.permute.xlu0 2
    %871 = vperm.xlu0 %870, %v40
    %v872 = vpop.permute.xlu0 %871
    %873 = vset.pattern.permute.xlu0 2
    %874 = vperm.xlu0 %873, %v41
    %v875 = vpop.permute.xlu0 %874
    %876 = vset.pattern.permute.xlu0 2
    %877 = vperm.xlu0 %876, %v42
    %v878 = vpop.permute.xlu0 %877
    %879 = vset.pattern.permute.xlu0 2
    %880 = vperm.xlu0 %879, %v43
    %v881 = vpop.permute.xlu0 %880
    %882 = vset.pattern.permute.xlu0 2
    %883 = vperm.xlu0 %882, %v44
    %v884 = vpop.permute.xlu0 %883
    %885 = vset.pattern.permute.xlu0 2
    %886 = vperm.xlu0 %885, %v45
    %v887 = vpop.permute.xlu0 %886
    %888 = vset.pattern.permute.xlu0 2
    %889 = vperm.xlu0 %888, %v46
    %v890 = vpop.permute.xlu0 %889
    %891 = vset.pattern.permute.xlu0 2
    %892 = vperm.xlu0 %891, %v47
    %v893 = vpop.permute.xlu0 %892
    %894 = vset.pattern.permute.xlu0 2
    %895 = vperm.xlu0 %894, %v48
    %v896 = vpop.permute.xlu0 %895
    %897 = vset.pattern.permute.xlu0 2
    %898 = vperm.xlu0 %897, %v49
    %v899 = vpop.permute.xlu0 %898
    %900 = vset.pattern.permute.xlu0 2
    %901 = vperm.xlu0 %900, %v50
    %v902 = vpop.permute.xlu0 %901
    %903 = vset.pattern.permute.xlu0 2
    %904 = vperm.xlu0 %903, %v51
    %v905 = vpop.permute.xlu0 %904
    %906 = vset.pattern.permute.xlu0 2
    %907 = vperm.xlu0 %906, %v52
    %v908 = vpop.permute.xlu0 %907
    %909 = vset.pattern.permute.xlu0 2
    %910 = vperm.xlu0 %909, %v53
    %v911 = vpop.permute.xlu0 %910
    %912 = vset.pattern.permute.xlu0 2
    %913 = vperm.xlu0 %912, %v54
    %v914 = vpop.permute.xlu0 %913
    %915 = vset.pattern.permute.xlu0 2
    %916 = vperm.xlu0 %915, %v55
    %v917 = vpop.permute.xlu0 %916
    %918 = vset.pattern.permute.xlu0 2
    %919 = vperm.xlu0 %918, %v56
    %v920 = vpop.permute.xlu0 %919
    %921 = vset.pattern.permute.xlu0 2
    %922 = vperm.xlu0 %921, %v57
    %v923 = vpop.permute.xlu0 %922
    %924 = vset.pattern.permute.xlu0 2
    %925 = vperm.xlu0 %924, %v58
    %v926 = vpop.permute.xlu0 %925
    %927 = vset.pattern.permute.xlu0 2
    %928 = vperm.xlu0 %927, %v59
    %v929 = vpop.permute.xlu0 %928
    %930 = vset.pattern.permute.xlu0 2
    %931 = vperm.xlu0 %930, %v60
    %v932 = vpop.permute.xlu0 %931
    %933 = vset.pattern.permute.xlu0 2
    %934 = vperm.xlu0 %933, %v61
    %v935 = vpop.permute.xlu0 %934
    %936 = vset.pattern.permute.xlu0 2
    %937 = vperm.xlu0 %936, %v62
    %v938 = vpop.permute.xlu0 %937
    %939 = vset.pattern.permute.xlu0 2
    %940 = vperm.xlu0 %939, %v63
    %v941 = vpop.permute.xlu0 %940
    %942 = vset.pattern.permute.xlu0 2
    %943 = vperm.xlu0 %942, %v64
    %v944 = vpop.permute.xlu0 %943
    %945 = vset.pattern.permute.xlu0 2
    %946 = vperm.xlu0 %945, %v65
    %v947 = vpop.permute.xlu0 %946
    %948 = vset.pattern.permute.xlu0 2
    %949 = vperm.xlu0 %948, %v66
    %v950 = vpop.permute.xlu0 %949
    %951 = vset.pattern.permute.xlu0 2
    %952 = vperm.xlu0 %951, %v67
    %v953 = vpop.permute.xlu0 %952
    %954 = vset.pattern.permute.xlu0 2
    %955 = vperm.xlu0 %954, %v68
    %v956 = vpop.permute.xlu0 %955
    %vm957 = vcmp.eq.s32.totalorder %v863, %v70
    %vm958 = vcmp.eq.s32.totalorder %v866, %v70
    %vm959 = vcmp.eq.s32.totalorder %v869, %v70
    %vm960 = vcmp.eq.s32.totalorder %v872, %v70
    %vm961 = vcmp.eq.s32.totalorder %v875, %v70
    %vm962 = vcmp.eq.s32.totalorder %v878, %v70
    %vm963 = vcmp.eq.s32.totalorder %v881, %v70
    %vm964 = vcmp.eq.s32.totalorder %v884, %v70
    %vm965 = vcmp.eq.s32.totalorder %v887, %v70
    %vm966 = vcmp.eq.s32.totalorder %v890, %v70
    %vm967 = vcmp.eq.s32.totalorder %v893, %v70
    %vm968 = vcmp.eq.s32.totalorder %v896, %v70
    %vm969 = vcmp.eq.s32.totalorder %v899, %v70
    %vm970 = vcmp.eq.s32.totalorder %v902, %v70
    %vm971 = vcmp.eq.s32.totalorder %v905, %v70
    %vm972 = vcmp.eq.s32.totalorder %v908, %v70
    %vm973 = vcmp.eq.s32.totalorder %v911, %v70
    %vm974 = vcmp.eq.s32.totalorder %v914, %v70
    %vm975 = vcmp.eq.s32.totalorder %v917, %v70
    %vm976 = vcmp.eq.s32.totalorder %v920, %v70
    %vm977 = vcmp.eq.s32.totalorder %v923, %v70
    %vm978 = vcmp.eq.s32.totalorder %v926, %v70
    %vm979 = vcmp.eq.s32.totalorder %v929, %v70
    %vm980 = vcmp.eq.s32.totalorder %v932, %v70
    %vm981 = vcmp.eq.s32.totalorder %v935, %v70
    %vm982 = vcmp.eq.s32.totalorder %v938, %v70
    %vm983 = vcmp.eq.s32.totalorder %v941, %v70
    %vm984 = vcmp.eq.s32.totalorder %v944, %v70
    %vm985 = vcmp.eq.s32.totalorder %v947, %v70
    %vm986 = vcmp.eq.s32.totalorder %v950, %v70
    %vm987 = vcmp.eq.s32.totalorder %v953, %v70
    %vm988 = vcmp.eq.s32.totalorder %v956, %v70
    %v989 = vsel %vm957, 1, 0
    %v990 = vsel %vm958, 1, 0
    %v991 = vsel %vm959, 1, 0
    %v992 = vsel %vm960, 1, 0
    %v993 = vsel %vm961, 1, 0
    %v994 = vsel %vm962, 1, 0
    %v995 = vsel %vm963, 1, 0
    %v996 = vsel %vm964, 1, 0
    %v997 = vsel %vm965, 1, 0
    %v998 = vsel %vm966, 1, 0
    %v999 = vsel %vm967, 1, 0
    %v1000 = vsel %vm968, 1, 0
    %v1001 = vsel %vm969, 1, 0
    %v1002 = vsel %vm970, 1, 0
    %v1003 = vsel %vm971, 1, 0
    %v1004 = vsel %vm972, 1, 0
    %v1005 = vsel %vm973, 1, 0
    %v1006 = vsel %vm974, 1, 0
    %v1007 = vsel %vm975, 1, 0
    %v1008 = vsel %vm976, 1, 0
    %v1009 = vsel %vm977, 1, 0
    %v1010 = vsel %vm978, 1, 0
    %v1011 = vsel %vm979, 1, 0
    %v1012 = vsel %vm980, 1, 0
    %v1013 = vsel %vm981, 1, 0
    %v1014 = vsel %vm982, 1, 0
    %v1015 = vsel %vm983, 1, 0
    %v1016 = vsel %vm984, 1, 0
    %v1017 = vsel %vm985, 1, 0
    %v1018 = vsel %vm986, 1, 0
    %v1019 = vsel %vm987, 1, 0
    %v1020 = vsel %vm988, 1, 0
    %v1021 = vcvt.s32.f32 %v989
    %v1022 = vcvt.s32.f32 %v990
    %v1023 = vcvt.s32.f32 %v991
    %v1024 = vcvt.s32.f32 %v992
    %v1025 = vcvt.s32.f32 %v993
    %v1026 = vcvt.s32.f32 %v994
    %v1027 = vcvt.s32.f32 %v995
    %v1028 = vcvt.s32.f32 %v996
    %v1029 = vcvt.s32.f32 %v997
    %v1030 = vcvt.s32.f32 %v998
    %v1031 = vcvt.s32.f32 %v999
    %v1032 = vcvt.s32.f32 %v1000
    %v1033 = vcvt.s32.f32 %v1001
    %v1034 = vcvt.s32.f32 %v1002
    %v1035 = vcvt.s32.f32 %v1003
    %v1036 = vcvt.s32.f32 %v1004
    %v1037 = vcvt.s32.f32 %v1005
    %v1038 = vcvt.s32.f32 %v1006
    %v1039 = vcvt.s32.f32 %v1007
    %v1040 = vcvt.s32.f32 %v1008
    %v1041 = vcvt.s32.f32 %v1009
    %v1042 = vcvt.s32.f32 %v1010
    %v1043 = vcvt.s32.f32 %v1011
    %v1044 = vcvt.s32.f32 %v1012
    %v1045 = vcvt.s32.f32 %v1013
    %v1046 = vcvt.s32.f32 %v1014
    %v1047 = vcvt.s32.f32 %v1015
    %v1048 = vcvt.s32.f32 %v1016
    %v1049 = vcvt.s32.f32 %v1017
    %v1050 = vcvt.s32.f32 %v1018
    %v1051 = vcvt.s32.f32 %v1019
    %v1052 = vcvt.s32.f32 %v1020
    %v1053 = vpack.c.bf16 %v1022, %v1021
    %v1054 = vpack.c.bf16 %v1024, %v1023
    %v1055 = vpack.c.bf16 %v1026, %v1025
    %v1056 = vpack.c.bf16 %v1028, %v1027
    %v1057 = vpack.c.bf16 %v1030, %v1029
    %v1058 = vpack.c.bf16 %v1032, %v1031
    %v1059 = vpack.c.bf16 %v1034, %v1033
    %v1060 = vpack.c.bf16 %v1036, %v1035
    %v1061 = vpack.c.bf16 %v1038, %v1037
    %v1062 = vpack.c.bf16 %v1040, %v1039
    %v1063 = vpack.c.bf16 %v1042, %v1041
    %v1064 = vpack.c.bf16 %v1044, %v1043
    %v1065 = vpack.c.bf16 %v1046, %v1045
    %v1066 = vpack.c.bf16 %v1048, %v1047
    %v1067 = vpack.c.bf16 %v1050, %v1049
    %v1068 = vpack.c.bf16 %v1052, %v1051
    %v1069 = vld [vmem:[%s1 + $0x80] sm:$0xf]
    %v1070 = vld [vmem:[%s1 + $0x84] sm:$0xf]
    %v1071 = vld [vmem:[%s1 + $0x88] sm:$0xf]
    %v1072 = vld [vmem:[%s1 + $0x8c] sm:$0xf]
    %v1073 = vld [vmem:[%s1 + $0x90] sm:$0xf]
    %v1074 = vld [vmem:[%s1 + $0x94] sm:$0xf]
    %v1075 = vld [vmem:[%s1 + $0x98] sm:$0xf]
    %v1076 = vld [vmem:[%s1 + $0x9c] sm:$0xf]
    %v1077 = vld [vmem:[%s1 + $0xa0] sm:$0xf]
    %v1078 = vld [vmem:[%s1 + $0xa4] sm:$0xf]
    %v1079 = vld [vmem:[%s1 + $0xa8] sm:$0xf]
    %v1080 = vld [vmem:[%s1 + $0xac] sm:$0xf]
    %v1081 = vld [vmem:[%s1 + $0xb0] sm:$0xf]
    %v1082 = vld [vmem:[%s1 + $0xb4] sm:$0xf]
    %v1083 = vld [vmem:[%s1 + $0xb8] sm:$0xf]
    %v1084 = vld [vmem:[%s1 + $0xbc] sm:$0xf]
    %v1101 = vunpack.c.l.b16 %v1069
    %v1102 = vunpack.c.l.b16 %v1070
    %v1103 = vunpack.c.l.b16 %v1071
    %v1104 = vunpack.c.l.b16 %v1072
    %v1105 = vunpack.c.l.b16 %v1073
    %v1106 = vunpack.c.l.b16 %v1074
    %v1107 = vunpack.c.l.b16 %v1075
    %v1108 = vunpack.c.l.b16 %v1076
    %v1109 = vunpack.c.l.b16 %v1077
    %v1110 = vunpack.c.l.b16 %v1078
    %v1111 = vunpack.c.l.b16 %v1079
    %v1112 = vunpack.c.l.b16 %v1080
    %v1113 = vunpack.c.l.b16 %v1081
    %v1114 = vunpack.c.l.b16 %v1082
    %v1115 = vunpack.c.l.b16 %v1083
    %v1116 = vunpack.c.l.b16 %v1084
    %v1117 = vpack.c.b16 %v1102, %v1101
    %v1118 = vpack.c.b16 %v1104, %v1103
    %v1119 = vpack.c.b16 %v1106, %v1105
    %v1120 = vpack.c.b16 %v1108, %v1107
    %v1121 = vpack.c.b16 %v1110, %v1109
    %v1122 = vpack.c.b16 %v1112, %v1111
    %v1123 = vpack.c.b16 %v1114, %v1113
    %v1124 = vpack.c.b16 %v1116, %v1115
    %1133 = vmatpush.bf16.msra.mxu0 %v1124
    %1134 = vmatpush.bf16.msra.mxu0 %v1123
    %1135 = vmatpush.bf16.msra.mxu0 %v1122
    %1136 = vmatpush.bf16.msra.mxu0 %v1121
    %1137 = vmatpush.bf16.msra.mxu0 %v1120
    %1138 = vmatpush.bf16.msra.mxu0 %v1119
    %1139 = vmatpush.bf16.msra.mxu0 %v1118
    %1140 = vmatpush.bf16.msra.mxu0 %v1117
    %1141 = vmatmul.bf16.gmra.mxu0 %v1053
    %v1142 = vpop.f32.mrf.mxu0
    %v1143 = vadd.f32 0.0, %v1142
    %v1144 = vpop.f32.mrf.mxu0
    %v1145 = vadd.f32 0.0, %v1144
    %1146 = vmatmul.bf16.gmra.mxu0 %v1054
    %v1147 = vpop.f32.mrf.mxu0
    %v1148 = vadd.f32 0.0, %v1147
    %v1149 = vpop.f32.mrf.mxu0
    %v1150 = vadd.f32 0.0, %v1149
    %1151 = vmatmul.bf16.gmra.mxu0 %v1055
    %v1152 = vpop.f32.mrf.mxu0
    %v1153 = vadd.f32 0.0, %v1152
    %v1154 = vpop.f32.mrf.mxu0
    %v1155 = vadd.f32 0.0, %v1154
    %1156 = vmatmul.bf16.gmra.mxu0 %v1056
    %v1157 = vpop.f32.mrf.mxu0
    %v1158 = vadd.f32 0.0, %v1157
    %v1159 = vpop.f32.mrf.mxu0
    %v1160 = vadd.f32 0.0, %v1159
    %1161 = vmatmul.bf16.gmra.mxu0 %v1057
    %v1162 = vpop.f32.mrf.mxu0
    %v1163 = vadd.f32 0.0, %v1162
    %v1164 = vpop.f32.mrf.mxu0
    %v1165 = vadd.f32 0.0, %v1164
    %1166 = vmatmul.bf16.gmra.mxu0 %v1058
    %v1167 = vpop.f32.mrf.mxu0
    %v1168 = vadd.f32 0.0, %v1167
    %v1169 = vpop.f32.mrf.mxu0
    %v1170 = vadd.f32 0.0, %v1169
    %1171 = vmatmul.bf16.gmra.mxu0 %v1059
    %v1172 = vpop.f32.mrf.mxu0
    %v1173 = vadd.f32 0.0, %v1172
    %v1174 = vpop.f32.mrf.mxu0
    %v1175 = vadd.f32 0.0, %v1174
    %1176 = vmatmul.bf16.gmra.mxu0 %v1060
    %v1177 = vpop.f32.mrf.mxu0
    %v1178 = vadd.f32 0.0, %v1177
    %v1179 = vpop.f32.mrf.mxu0
    %v1180 = vadd.f32 0.0, %v1179
    %1181 = vmatmul.bf16.gmra.mxu0 %v1061
    %v1182 = vpop.f32.mrf.mxu0
    %v1183 = vadd.f32 0.0, %v1182
    %v1184 = vpop.f32.mrf.mxu0
    %v1185 = vadd.f32 0.0, %v1184
    %1186 = vmatmul.bf16.gmra.mxu0 %v1062
    %v1187 = vpop.f32.mrf.mxu0
    %v1188 = vadd.f32 0.0, %v1187
    %v1189 = vpop.f32.mrf.mxu0
    %v1190 = vadd.f32 0.0, %v1189
    %1191 = vmatmul.bf16.gmra.mxu0 %v1063
    %v1192 = vpop.f32.mrf.mxu0
    %v1193 = vadd.f32 0.0, %v1192
    %v1194 = vpop.f32.mrf.mxu0
    %v1195 = vadd.f32 0.0, %v1194
    %1196 = vmatmul.bf16.gmra.mxu0 %v1064
    %v1197 = vpop.f32.mrf.mxu0
    %v1198 = vadd.f32 0.0, %v1197
    %v1199 = vpop.f32.mrf.mxu0
    %v1200 = vadd.f32 0.0, %v1199
    %1201 = vmatmul.bf16.gmra.mxu0 %v1065
    %v1202 = vpop.f32.mrf.mxu0
    %v1203 = vadd.f32 0.0, %v1202
    %v1204 = vpop.f32.mrf.mxu0
    %v1205 = vadd.f32 0.0, %v1204
    %1206 = vmatmul.bf16.gmra.mxu0 %v1066
    %v1207 = vpop.f32.mrf.mxu0
    %v1208 = vadd.f32 0.0, %v1207
    %v1209 = vpop.f32.mrf.mxu0
    %v1210 = vadd.f32 0.0, %v1209
    %1211 = vmatmul.bf16.gmra.mxu0 %v1067
    %v1212 = vpop.f32.mrf.mxu0
    %v1213 = vadd.f32 0.0, %v1212
    %v1214 = vpop.f32.mrf.mxu0
    %v1215 = vadd.f32 0.0, %v1214
    %1216 = vmatmul.bf16.gmra.mxu0 %v1068
    %v1217 = vpop.f32.mrf.mxu0
    %v1218 = vadd.f32 0.0, %v1217
    %v1219 = vpop.f32.mrf.mxu0
    %v1220 = vadd.f32 0.0, %v1219
    %1221 = vdwg.mxu0
    %v1222 = vadd.f32 %v829, %v1143
    %v1223 = vadd.f32 %v830, %v1145
    %v1224 = vadd.f32 %v831, %v1148
    %v1225 = vadd.f32 %v832, %v1150
    %v1226 = vadd.f32 %v833, %v1153
    %v1227 = vadd.f32 %v834, %v1155
    %v1228 = vadd.f32 %v835, %v1158
    %v1229 = vadd.f32 %v836, %v1160
    %v1230 = vadd.f32 %v837, %v1163
    %v1231 = vadd.f32 %v838, %v1165
    %v1232 = vadd.f32 %v839, %v1168
    %v1233 = vadd.f32 %v840, %v1170
    %v1234 = vadd.f32 %v841, %v1173
    %v1235 = vadd.f32 %v842, %v1175
    %v1236 = vadd.f32 %v843, %v1178
    %v1237 = vadd.f32 %v844, %v1180
    %v1238 = vadd.f32 %v845, %v1183
    %v1239 = vadd.f32 %v846, %v1185
    %v1240 = vadd.f32 %v847, %v1188
    %v1241 = vadd.f32 %v848, %v1190
    %v1242 = vadd.f32 %v849, %v1193
    %v1243 = vadd.f32 %v850, %v1195
    %v1244 = vadd.f32 %v851, %v1198
    %v1245 = vadd.f32 %v852, %v1200
    %v1246 = vadd.f32 %v853, %v1203
    %v1247 = vadd.f32 %v854, %v1205
    %v1248 = vadd.f32 %v855, %v1208
    %v1249 = vadd.f32 %v856, %v1210
    %v1250 = vadd.f32 %v857, %v1213
    %v1251 = vadd.f32 %v858, %v1215
    %v1252 = vadd.f32 %v859, %v1218
    %v1253 = vadd.f32 %v860, %v1220
    %1254 = vset.pattern.permute.xlu0 3
    %1255 = vperm.xlu0 %1254, %v37
    %v1256 = vpop.permute.xlu0 %1255
    %1257 = vset.pattern.permute.xlu0 3
    %1258 = vperm.xlu0 %1257, %v38
    %v1259 = vpop.permute.xlu0 %1258
    %1260 = vset.pattern.permute.xlu0 3
    %1261 = vperm.xlu0 %1260, %v39
    %v1262 = vpop.permute.xlu0 %1261
    %1263 = vset.pattern.permute.xlu0 3
    %1264 = vperm.xlu0 %1263, %v40
    %v1265 = vpop.permute.xlu0 %1264
    %1266 = vset.pattern.permute.xlu0 3
    %1267 = vperm.xlu0 %1266, %v41
    %v1268 = vpop.permute.xlu0 %1267
    %1269 = vset.pattern.permute.xlu0 3
    %1270 = vperm.xlu0 %1269, %v42
    %v1271 = vpop.permute.xlu0 %1270
    %1272 = vset.pattern.permute.xlu0 3
    %1273 = vperm.xlu0 %1272, %v43
    %v1274 = vpop.permute.xlu0 %1273
    %1275 = vset.pattern.permute.xlu0 3
    %1276 = vperm.xlu0 %1275, %v44
    %v1277 = vpop.permute.xlu0 %1276
    %1278 = vset.pattern.permute.xlu0 3
    %1279 = vperm.xlu0 %1278, %v45
    %v1280 = vpop.permute.xlu0 %1279
    %1281 = vset.pattern.permute.xlu0 3
    %1282 = vperm.xlu0 %1281, %v46
    %v1283 = vpop.permute.xlu0 %1282
    %1284 = vset.pattern.permute.xlu0 3
    %1285 = vperm.xlu0 %1284, %v47
    %v1286 = vpop.permute.xlu0 %1285
    %1287 = vset.pattern.permute.xlu0 3
    %1288 = vperm.xlu0 %1287, %v48
    %v1289 = vpop.permute.xlu0 %1288
    %1290 = vset.pattern.permute.xlu0 3
    %1291 = vperm.xlu0 %1290, %v49
    %v1292 = vpop.permute.xlu0 %1291
    %1293 = vset.pattern.permute.xlu0 3
    %1294 = vperm.xlu0 %1293, %v50
    %v1295 = vpop.permute.xlu0 %1294
    %1296 = vset.pattern.permute.xlu0 3
    %1297 = vperm.xlu0 %1296, %v51
    %v1298 = vpop.permute.xlu0 %1297
    %1299 = vset.pattern.permute.xlu0 3
    %1300 = vperm.xlu0 %1299, %v52
    %v1301 = vpop.permute.xlu0 %1300
    %1302 = vset.pattern.permute.xlu0 3
    %1303 = vperm.xlu0 %1302, %v53
    %v1304 = vpop.permute.xlu0 %1303
    %1305 = vset.pattern.permute.xlu0 3
    %1306 = vperm.xlu0 %1305, %v54
    %v1307 = vpop.permute.xlu0 %1306
    %1308 = vset.pattern.permute.xlu0 3
    %1309 = vperm.xlu0 %1308, %v55
    %v1310 = vpop.permute.xlu0 %1309
    %1311 = vset.pattern.permute.xlu0 3
    %1312 = vperm.xlu0 %1311, %v56
    %v1313 = vpop.permute.xlu0 %1312
    %1314 = vset.pattern.permute.xlu0 3
    %1315 = vperm.xlu0 %1314, %v57
    %v1316 = vpop.permute.xlu0 %1315
    %1317 = vset.pattern.permute.xlu0 3
    %1318 = vperm.xlu0 %1317, %v58
    %v1319 = vpop.permute.xlu0 %1318
    %1320 = vset.pattern.permute.xlu0 3
    %1321 = vperm.xlu0 %1320, %v59
    %v1322 = vpop.permute.xlu0 %1321
    %1323 = vset.pattern.permute.xlu0 3
    %1324 = vperm.xlu0 %1323, %v60
    %v1325 = vpop.permute.xlu0 %1324
    %1326 = vset.pattern.permute.xlu0 3
    %1327 = vperm.xlu0 %1326, %v61
    %v1328 = vpop.permute.xlu0 %1327
    %1329 = vset.pattern.permute.xlu0 3
    %1330 = vperm.xlu0 %1329, %v62
    %v1331 = vpop.permute.xlu0 %1330
    %1332 = vset.pattern.permute.xlu0 3
    %1333 = vperm.xlu0 %1332, %v63
    %v1334 = vpop.permute.xlu0 %1333
    %1335 = vset.pattern.permute.xlu0 3
    %1336 = vperm.xlu0 %1335, %v64
    %v1337 = vpop.permute.xlu0 %1336
    %1338 = vset.pattern.permute.xlu0 3
    %1339 = vperm.xlu0 %1338, %v65
    %v1340 = vpop.permute.xlu0 %1339
    %1341 = vset.pattern.permute.xlu0 3
    %1342 = vperm.xlu0 %1341, %v66
    %v1343 = vpop.permute.xlu0 %1342
    %1344 = vset.pattern.permute.xlu0 3
    %1345 = vperm.xlu0 %1344, %v67
    %v1346 = vpop.permute.xlu0 %1345
    %1347 = vset.pattern.permute.xlu0 3
    %1348 = vperm.xlu0 %1347, %v68
    %v1349 = vpop.permute.xlu0 %1348
    %vm1350 = vcmp.eq.s32.totalorder %v1256, %v70
    %vm1351 = vcmp.eq.s32.totalorder %v1259, %v70
    %vm1352 = vcmp.eq.s32.totalorder %v1262, %v70
    %vm1353 = vcmp.eq.s32.totalorder %v1265, %v70
    %vm1354 = vcmp.eq.s32.totalorder %v1268, %v70
    %vm1355 = vcmp.eq.s32.totalorder %v1271, %v70
    %vm1356 = vcmp.eq.s32.totalorder %v1274, %v70
    %vm1357 = vcmp.eq.s32.totalorder %v1277, %v70
    %vm1358 = vcmp.eq.s32.totalorder %v1280, %v70
    %vm1359 = vcmp.eq.s32.totalorder %v1283, %v70
    %vm1360 = vcmp.eq.s32.totalorder %v1286, %v70
    %vm1361 = vcmp.eq.s32.totalorder %v1289, %v70
    %vm1362 = vcmp.eq.s32.totalorder %v1292, %v70
    %vm1363 = vcmp.eq.s32.totalorder %v1295, %v70
    %vm1364 = vcmp.eq.s32.totalorder %v1298, %v70
    %vm1365 = vcmp.eq.s32.totalorder %v1301, %v70
    %vm1366 = vcmp.eq.s32.totalorder %v1304, %v70
    %vm1367 = vcmp.eq.s32.totalorder %v1307, %v70
    %vm1368 = vcmp.eq.s32.totalorder %v1310, %v70
    %vm1369 = vcmp.eq.s32.totalorder %v1313, %v70
    %vm1370 = vcmp.eq.s32.totalorder %v1316, %v70
    %vm1371 = vcmp.eq.s32.totalorder %v1319, %v70
    %vm1372 = vcmp.eq.s32.totalorder %v1322, %v70
    %vm1373 = vcmp.eq.s32.totalorder %v1325, %v70
    %vm1374 = vcmp.eq.s32.totalorder %v1328, %v70
    %vm1375 = vcmp.eq.s32.totalorder %v1331, %v70
    %vm1376 = vcmp.eq.s32.totalorder %v1334, %v70
    %vm1377 = vcmp.eq.s32.totalorder %v1337, %v70
    %vm1378 = vcmp.eq.s32.totalorder %v1340, %v70
    %vm1379 = vcmp.eq.s32.totalorder %v1343, %v70
    %vm1380 = vcmp.eq.s32.totalorder %v1346, %v70
    %vm1381 = vcmp.eq.s32.totalorder %v1349, %v70
    %v1382 = vsel %vm1350, 1, 0
    %v1383 = vsel %vm1351, 1, 0
    %v1384 = vsel %vm1352, 1, 0
    %v1385 = vsel %vm1353, 1, 0
    %v1386 = vsel %vm1354, 1, 0
    %v1387 = vsel %vm1355, 1, 0
    %v1388 = vsel %vm1356, 1, 0
    %v1389 = vsel %vm1357, 1, 0
    %v1390 = vsel %vm1358, 1, 0
    %v1391 = vsel %vm1359, 1, 0
    %v1392 = vsel %vm1360, 1, 0
    %v1393 = vsel %vm1361, 1, 0
    %v1394 = vsel %vm1362, 1, 0
    %v1395 = vsel %vm1363, 1, 0
    %v1396 = vsel %vm1364, 1, 0
    %v1397 = vsel %vm1365, 1, 0
    %v1398 = vsel %vm1366, 1, 0
    %v1399 = vsel %vm1367, 1, 0
    %v1400 = vsel %vm1368, 1, 0
    %v1401 = vsel %vm1369, 1, 0
    %v1402 = vsel %vm1370, 1, 0
    %v1403 = vsel %vm1371, 1, 0
    %v1404 = vsel %vm1372, 1, 0
    %v1405 = vsel %vm1373, 1, 0
    %v1406 = vsel %vm1374, 1, 0
    %v1407 = vsel %vm1375, 1, 0
    %v1408 = vsel %vm1376, 1, 0
    %v1409 = vsel %vm1377, 1, 0
    %v1410 = vsel %vm1378, 1, 0
    %v1411 = vsel %vm1379, 1, 0
    %v1412 = vsel %vm1380, 1, 0
    %v1413 = vsel %vm1381, 1, 0
    %v1414 = vcvt.s32.f32 %v1382
    %v1415 = vcvt.s32.f32 %v1383
    %v1416 = vcvt.s32.f32 %v1384
    %v1417 = vcvt.s32.f32 %v1385
    %v1418 = vcvt.s32.f32 %v1386
    %v1419 = vcvt.s32.f32 %v1387
    %v1420 = vcvt.s32.f32 %v1388
    %v1421 = vcvt.s32.f32 %v1389
    %v1422 = vcvt.s32.f32 %v1390
    %v1423 = vcvt.s32.f32 %v1391
    %v1424 = vcvt.s32.f32 %v1392
    %v1425 = vcvt.s32.f32 %v1393
    %v1426 = vcvt.s32.f32 %v1394
    %v1427 = vcvt.s32.f32 %v1395
    %v1428 = vcvt.s32.f32 %v1396
    %v1429 = vcvt.s32.f32 %v1397
    %v1430 = vcvt.s32.f32 %v1398
    %v1431 = vcvt.s32.f32 %v1399
    %v1432 = vcvt.s32.f32 %v1400
    %v1433 = vcvt.s32.f32 %v1401
    %v1434 = vcvt.s32.f32 %v1402
    %v1435 = vcvt.s32.f32 %v1403
    %v1436 = vcvt.s32.f32 %v1404
    %v1437 = vcvt.s32.f32 %v1405
    %v1438 = vcvt.s32.f32 %v1406
    %v1439 = vcvt.s32.f32 %v1407
    %v1440 = vcvt.s32.f32 %v1408
    %v1441 = vcvt.s32.f32 %v1409
    %v1442 = vcvt.s32.f32 %v1410
    %v1443 = vcvt.s32.f32 %v1411
    %v1444 = vcvt.s32.f32 %v1412
    %v1445 = vcvt.s32.f32 %v1413
    %v1446 = vpack.c.bf16 %v1415, %v1414
    %v1447 = vpack.c.bf16 %v1417, %v1416
    %v1448 = vpack.c.bf16 %v1419, %v1418
    %v1449 = vpack.c.bf16 %v1421, %v1420
    %v1450 = vpack.c.bf16 %v1423, %v1422
    %v1451 = vpack.c.bf16 %v1425, %v1424
    %v1452 = vpack.c.bf16 %v1427, %v1426
    %v1453 = vpack.c.bf16 %v1429, %v1428
    %v1454 = vpack.c.bf16 %v1431, %v1430
    %v1455 = vpack.c.bf16 %v1433, %v1432
    %v1456 = vpack.c.bf16 %v1435, %v1434
    %v1457 = vpack.c.bf16 %v1437, %v1436
    %v1458 = vpack.c.bf16 %v1439, %v1438
    %v1459 = vpack.c.bf16 %v1441, %v1440
    %v1460 = vpack.c.bf16 %v1443, %v1442
    %v1461 = vpack.c.bf16 %v1445, %v1444
    %v1462 = vld [vmem:[%s1 + $0xc0] sm:$0xf]
    %v1463 = vld [vmem:[%s1 + $0xc4] sm:$0xf]
    %v1464 = vld [vmem:[%s1 + $0xc8] sm:$0xf]
    %v1465 = vld [vmem:[%s1 + $0xcc] sm:$0xf]
    %v1466 = vld [vmem:[%s1 + $0xd0] sm:$0xf]
    %v1467 = vld [vmem:[%s1 + $0xd4] sm:$0xf]
    %v1468 = vld [vmem:[%s1 + $0xd8] sm:$0xf]
    %v1469 = vld [vmem:[%s1 + $0xdc] sm:$0xf]
    %v1470 = vld [vmem:[%s1 + $0xe0] sm:$0xf]
    %v1471 = vld [vmem:[%s1 + $0xe4] sm:$0xf]
    %v1472 = vld [vmem:[%s1 + $0xe8] sm:$0xf]
    %v1473 = vld [vmem:[%s1 + $0xec] sm:$0xf]
    %v1474 = vld [vmem:[%s1 + $0xf0] sm:$0xf]
    %v1475 = vld [vmem:[%s1 + $0xf4] sm:$0xf]
    %v1476 = vld [vmem:[%s1 + $0xf8] sm:$0xf]
    %v1477 = vld [vmem:[%s1 + $0xfc] sm:$0xf]
    %v1494 = vunpack.c.l.b16 %v1462
    %v1495 = vunpack.c.l.b16 %v1463
    %v1496 = vunpack.c.l.b16 %v1464
    %v1497 = vunpack.c.l.b16 %v1465
    %v1498 = vunpack.c.l.b16 %v1466
    %v1499 = vunpack.c.l.b16 %v1467
    %v1500 = vunpack.c.l.b16 %v1468
    %v1501 = vunpack.c.l.b16 %v1469
    %v1502 = vunpack.c.l.b16 %v1470
    %v1503 = vunpack.c.l.b16 %v1471
    %v1504 = vunpack.c.l.b16 %v1472
    %v1505 = vunpack.c.l.b16 %v1473
    %v1506 = vunpack.c.l.b16 %v1474
    %v1507 = vunpack.c.l.b16 %v1475
    %v1508 = vunpack.c.l.b16 %v1476
    %v1509 = vunpack.c.l.b16 %v1477
    %v1510 = vpack.c.b16 %v1495, %v1494
    %v1511 = vpack.c.b16 %v1497, %v1496
    %v1512 = vpack.c.b16 %v1499, %v1498
    %v1513 = vpack.c.b16 %v1501, %v1500
    %v1514 = vpack.c.b16 %v1503, %v1502
    %v1515 = vpack.c.b16 %v1505, %v1504
    %v1516 = vpack.c.b16 %v1507, %v1506
    %v1517 = vpack.c.b16 %v1509, %v1508
    %1526 = vmatpush.bf16.msra.mxu0 %v1517
    %1527 = vmatpush.bf16.msra.mxu0 %v1516
    %1528 = vmatpush.bf16.msra.mxu0 %v1515
    %1529 = vmatpush.bf16.msra.mxu0 %v1514
    %1530 = vmatpush.bf16.msra.mxu0 %v1513
    %1531 = vmatpush.bf16.msra.mxu0 %v1512
    %1532 = vmatpush.bf16.msra.mxu0 %v1511
    %1533 = vmatpush.bf16.msra.mxu0 %v1510
    %1534 = vmatmul.bf16.gmra.mxu0 %v1446
    %v1535 = vpop.f32.mrf.mxu0
    %v1536 = vadd.f32 0.0, %v1535
    %v1537 = vpop.f32.mrf.mxu0
    %v1538 = vadd.f32 0.0, %v1537
    %1539 = vmatmul.bf16.gmra.mxu0 %v1447
    %v1540 = vpop.f32.mrf.mxu0
    %v1541 = vadd.f32 0.0, %v1540
    %v1542 = vpop.f32.mrf.mxu0
    %v1543 = vadd.f32 0.0, %v1542
    %1544 = vmatmul.bf16.gmra.mxu0 %v1448
    %v1545 = vpop.f32.mrf.mxu0
    %v1546 = vadd.f32 0.0, %v1545
    %v1547 = vpop.f32.mrf.mxu0
    %v1548 = vadd.f32 0.0, %v1547
    %1549 = vmatmul.bf16.gmra.mxu0 %v1449
    %v1550 = vpop.f32.mrf.mxu0
    %v1551 = vadd.f32 0.0, %v1550
    %v1552 = vpop.f32.mrf.mxu0
    %v1553 = vadd.f32 0.0, %v1552
    %1554 = vmatmul.bf16.gmra.mxu0 %v1450
    %v1555 = vpop.f32.mrf.mxu0
    %v1556 = vadd.f32 0.0, %v1555
    %v1557 = vpop.f32.mrf.mxu0
    %v1558 = vadd.f32 0.0, %v1557
    %1559 = vmatmul.bf16.gmra.mxu0 %v1451
    %v1560 = vpop.f32.mrf.mxu0
    %v1561 = vadd.f32 0.0, %v1560
    %v1562 = vpop.f32.mrf.mxu0
    %v1563 = vadd.f32 0.0, %v1562
    %1564 = vmatmul.bf16.gmra.mxu0 %v1452
    %v1565 = vpop.f32.mrf.mxu0
    %v1566 = vadd.f32 0.0, %v1565
    %v1567 = vpop.f32.mrf.mxu0
    %v1568 = vadd.f32 0.0, %v1567
    %1569 = vmatmul.bf16.gmra.mxu0 %v1453
    %v1570 = vpop.f32.mrf.mxu0
    %v1571 = vadd.f32 0.0, %v1570
    %v1572 = vpop.f32.mrf.mxu0
    %v1573 = vadd.f32 0.0, %v1572
    %1574 = vmatmul.bf16.gmra.mxu0 %v1454
    %v1575 = vpop.f32.mrf.mxu0
    %v1576 = vadd.f32 0.0, %v1575
    %v1577 = vpop.f32.mrf.mxu0
    %v1578 = vadd.f32 0.0, %v1577
    %1579 = vmatmul.bf16.gmra.mxu0 %v1455
    %v1580 = vpop.f32.mrf.mxu0
    %v1581 = vadd.f32 0.0, %v1580
    %v1582 = vpop.f32.mrf.mxu0
    %v1583 = vadd.f32 0.0, %v1582
    %1584 = vmatmul.bf16.gmra.mxu0 %v1456
    %v1585 = vpop.f32.mrf.mxu0
    %v1586 = vadd.f32 0.0, %v1585
    %v1587 = vpop.f32.mrf.mxu0
    %v1588 = vadd.f32 0.0, %v1587
    %1589 = vmatmul.bf16.gmra.mxu0 %v1457
    %v1590 = vpop.f32.mrf.mxu0
    %v1591 = vadd.f32 0.0, %v1590
    %v1592 = vpop.f32.mrf.mxu0
    %v1593 = vadd.f32 0.0, %v1592
    %1594 = vmatmul.bf16.gmra.mxu0 %v1458
    %v1595 = vpop.f32.mrf.mxu0
    %v1596 = vadd.f32 0.0, %v1595
    %v1597 = vpop.f32.mrf.mxu0
    %v1598 = vadd.f32 0.0, %v1597
    %1599 = vmatmul.bf16.gmra.mxu0 %v1459
    %v1600 = vpop.f32.mrf.mxu0
    %v1601 = vadd.f32 0.0, %v1600
    %v1602 = vpop.f32.mrf.mxu0
    %v1603 = vadd.f32 0.0, %v1602
    %1604 = vmatmul.bf16.gmra.mxu0 %v1460
    %v1605 = vpop.f32.mrf.mxu0
    %v1606 = vadd.f32 0.0, %v1605
    %v1607 = vpop.f32.mrf.mxu0
    %v1608 = vadd.f32 0.0, %v1607
    %1609 = vmatmul.bf16.gmra.mxu0 %v1461
    %v1610 = vpop.f32.mrf.mxu0
    %v1611 = vadd.f32 0.0, %v1610
    %v1612 = vpop.f32.mrf.mxu0
    %v1613 = vadd.f32 0.0, %v1612
    %1614 = vdwg.mxu0
    %v1615 = vadd.f32 %v1222, %v1536
    %v1616 = vadd.f32 %v1223, %v1538
    %v1617 = vadd.f32 %v1224, %v1541
    %v1618 = vadd.f32 %v1225, %v1543
    %v1619 = vadd.f32 %v1226, %v1546
    %v1620 = vadd.f32 %v1227, %v1548
    %v1621 = vadd.f32 %v1228, %v1551
    %v1622 = vadd.f32 %v1229, %v1553
    %v1623 = vadd.f32 %v1230, %v1556
    %v1624 = vadd.f32 %v1231, %v1558
    %v1625 = vadd.f32 %v1232, %v1561
    %v1626 = vadd.f32 %v1233, %v1563
    %v1627 = vadd.f32 %v1234, %v1566
    %v1628 = vadd.f32 %v1235, %v1568
    %v1629 = vadd.f32 %v1236, %v1571
    %v1630 = vadd.f32 %v1237, %v1573
    %v1631 = vadd.f32 %v1238, %v1576
    %v1632 = vadd.f32 %v1239, %v1578
    %v1633 = vadd.f32 %v1240, %v1581
    %v1634 = vadd.f32 %v1241, %v1583
    %v1635 = vadd.f32 %v1242, %v1586
    %v1636 = vadd.f32 %v1243, %v1588
    %v1637 = vadd.f32 %v1244, %v1591
    %v1638 = vadd.f32 %v1245, %v1593
    %v1639 = vadd.f32 %v1246, %v1596
    %v1640 = vadd.f32 %v1247, %v1598
    %v1641 = vadd.f32 %v1248, %v1601
    %v1642 = vadd.f32 %v1249, %v1603
    %v1643 = vadd.f32 %v1250, %v1606
    %v1644 = vadd.f32 %v1251, %v1608
    %v1645 = vadd.f32 %v1252, %v1611
    %v1646 = vadd.f32 %v1253, %v1613
    %v1647 = vmax.f32 %v1615, 0.0
    %v1648 = vmax.f32 %v1616, 0.0
    %v1649 = vmax.f32 %v1617, 0.0
    %v1650 = vmax.f32 %v1618, 0.0
    %v1651 = vmax.f32 %v1619, 0.0
    %v1652 = vmax.f32 %v1620, 0.0
    %v1653 = vmax.f32 %v1621, 0.0
    %v1654 = vmax.f32 %v1622, 0.0
    %v1655 = vmax.f32 %v1623, 0.0
    %v1656 = vmax.f32 %v1624, 0.0
    %v1657 = vmax.f32 %v1625, 0.0
    %v1658 = vmax.f32 %v1626, 0.0
    %v1659 = vmax.f32 %v1627, 0.0
    %v1660 = vmax.f32 %v1628, 0.0
    %v1661 = vmax.f32 %v1629, 0.0
    %v1662 = vmax.f32 %v1630, 0.0
    %v1663 = vmax.f32 %v1631, 0.0
    %v1664 = vmax.f32 %v1632, 0.0
    %v1665 = vmax.f32 %v1633, 0.0
    %v1666 = vmax.f32 %v1634, 0.0
    %v1667 = vmax.f32 %v1635, 0.0
    %v1668 = vmax.f32 %v1636, 0.0
    %v1669 = vmax.f32 %v1637, 0.0
    %v1670 = vmax.f32 %v1638, 0.0
    %v1671 = vmax.f32 %v1639, 0.0
    %v1672 = vmax.f32 %v1640, 0.0
    %v1673 = vmax.f32 %v1641, 0.0
    %v1674 = vmax.f32 %v1642, 0.0
    %v1675 = vmax.f32 %v1643, 0.0
    %v1676 = vmax.f32 %v1644, 0.0
    %v1677 = vmax.f32 %v1645, 0.0
    %v1678 = vmax.f32 %v1646, 0.0
    %v1679 = vpack.c.bf16 %v1648, %v1647
    %v1680 = vpack.c.bf16 %v1650, %v1649
    %v1681 = vpack.c.bf16 %v1652, %v1651
    %v1682 = vpack.c.bf16 %v1654, %v1653
    %v1683 = vpack.c.bf16 %v1656, %v1655
    %v1684 = vpack.c.bf16 %v1658, %v1657
    %v1685 = vpack.c.bf16 %v1660, %v1659
    %v1686 = vpack.c.bf16 %v1662, %v1661
    %v1687 = vpack.c.bf16 %v1664, %v1663
    %v1688 = vpack.c.bf16 %v1666, %v1665
    %v1689 = vpack.c.bf16 %v1668, %v1667
    %v1690 = vpack.c.bf16 %v1670, %v1669
    %v1691 = vpack.c.bf16 %v1672, %v1671
    %v1692 = vpack.c.bf16 %v1674, %v1673
    %v1693 = vpack.c.bf16 %v1676, %v1675
    %v1694 = vpack.c.bf16 %v1678, %v1677
    %v1695 = vld [vmem:[#allocation2] sm:$0xf]
    %v1696 = vld [vmem:[#allocation2 + $0x4] sm:$0xf]
    %v1697 = vld [vmem:[#allocation2 + $0x8] sm:$0xf]
    %v1698 = vld [vmem:[#allocation2 + $0xc] sm:$0xf]
    %v1699 = vld [vmem:[#allocation2 + $0x10] sm:$0xf]
    %v1700 = vld [vmem:[#allocation2 + $0x14] sm:$0xf]
    %v1701 = vld [vmem:[#allocation2 + $0x18] sm:$0xf]
    %v1702 = vld [vmem:[#allocation2 + $0x1c] sm:$0xf]
    %v1703 = vld [vmem:[#allocation2 + $0x20] sm:$0xf]
    %v1704 = vld [vmem:[#allocation2 + $0x24] sm:$0xf]
    %v1705 = vld [vmem:[#allocation2 + $0x28] sm:$0xf]
    %v1706 = vld [vmem:[#allocation2 + $0x2c] sm:$0xf]
    %v1707 = vld [vmem:[#allocation2 + $0x30] sm:$0xf]
    %v1708 = vld [vmem:[#allocation2 + $0x34] sm:$0xf]
    %v1709 = vld [vmem:[#allocation2 + $0x38] sm:$0xf]
    %v1710 = vld [vmem:[#allocation2 + $0x3c] sm:$0xf]
    %v1711 = vld [vmem:[%s4] sm:$0x1]
    %v1713 = vperm.slane %v1711, 0
    %v1731 = vunpack.c.l.b16 %v1695
    %v1732 = vunpack.c.l.b16 %v1696
    %v1733 = vunpack.c.l.b16 %v1697
    %v1734 = vunpack.c.l.b16 %v1698
    %v1735 = vunpack.c.l.b16 %v1699
    %v1736 = vunpack.c.l.b16 %v1700
    %v1737 = vunpack.c.l.b16 %v1701
    %v1738 = vunpack.c.l.b16 %v1702
    %v1739 = vunpack.c.l.b16 %v1703
    %v1740 = vunpack.c.l.b16 %v1704
    %v1741 = vunpack.c.l.b16 %v1705
    %v1742 = vunpack.c.l.b16 %v1706
    %v1743 = vunpack.c.l.b16 %v1707
    %v1744 = vunpack.c.l.b16 %v1708
    %v1745 = vunpack.c.l.b16 %v1709
    %v1746 = vunpack.c.l.b16 %v1710
    %v1747 = vpack.c.b16 %v1732, %v1731
    %v1748 = vpack.c.b16 %v1734, %v1733
    %v1749 = vpack.c.b16 %v1736, %v1735
    %v1750 = vpack.c.b16 %v1738, %v1737
    %v1751 = vpack.c.b16 %v1740, %v1739
    %v1752 = vpack.c.b16 %v1742, %v1741
    %v1753 = vpack.c.b16 %v1744, %v1743
    %v1754 = vpack.c.b16 %v1746, %v1745
    %1763 = vmatpush.bf16.msra.mxu0 %v1754
    %1764 = vmatpush.bf16.msra.mxu0 %v1753
    %1765 = vmatpush.bf16.msra.mxu0 %v1752
    %1766 = vmatpush.bf16.msra.mxu0 %v1751
    %1767 = vmatpush.bf16.msra.mxu0 %v1750
    %1768 = vmatpush.bf16.msra.mxu0 %v1749
    %1769 = vmatpush.bf16.msra.mxu0 %v1748
    %1770 = vmatpush.bf16.msra.mxu0 %v1747
    %1771 = vmatmul.bf16.gmra.mxu0 %v1679
    %v1772 = vpop.f32.mrf.mxu0
    %v1773 = vadd.f32 %v1713, %v1772
    %v1774 = vpop.f32.mrf.mxu0
    %v1775 = vadd.f32 %v1713, %v1774
    %1776 = vmatmul.bf16.gmra.mxu0 %v1680
    %v1777 = vpop.f32.mrf.mxu0
    %v1778 = vadd.f32 %v1713, %v1777
    %v1779 = vpop.f32.mrf.mxu0
    %v1780 = vadd.f32 %v1713, %v1779
    %1781 = vmatmul.bf16.gmra.mxu0 %v1681
    %v1782 = vpop.f32.mrf.mxu0
    %v1783 = vadd.f32 %v1713, %v1782
    %v1784 = vpop.f32.mrf.mxu0
    %v1785 = vadd.f32 %v1713, %v1784
    %1786 = vmatmul.bf16.gmra.mxu0 %v1682
    %v1787 = vpop.f32.mrf.mxu0
    %v1788 = vadd.f32 %v1713, %v1787
    %v1789 = vpop.f32.mrf.mxu0
    %v1790 = vadd.f32 %v1713, %v1789
    %1791 = vmatmul.bf16.gmra.mxu0 %v1683
    %v1792 = vpop.f32.mrf.mxu0
    %v1793 = vadd.f32 %v1713, %v1792
    %v1794 = vpop.f32.mrf.mxu0
    %v1795 = vadd.f32 %v1713, %v1794
    %1796 = vmatmul.bf16.gmra.mxu0 %v1684
    %v1797 = vpop.f32.mrf.mxu0
    %v1798 = vadd.f32 %v1713, %v1797
    %v1799 = vpop.f32.mrf.mxu0
    %v1800 = vadd.f32 %v1713, %v1799
    %1801 = vmatmul.bf16.gmra.mxu0 %v1685
    %v1802 = vpop.f32.mrf.mxu0
    %v1803 = vadd.f32 %v1713, %v1802
    %v1804 = vpop.f32.mrf.mxu0
    %v1805 = vadd.f32 %v1713, %v1804
    %1806 = vmatmul.bf16.gmra.mxu0 %v1686
    %v1807 = vpop.f32.mrf.mxu0
    %v1808 = vadd.f32 %v1713, %v1807
    %v1809 = vpop.f32.mrf.mxu0
    %v1810 = vadd.f32 %v1713, %v1809
    %1811 = vmatmul.bf16.gmra.mxu0 %v1687
    %v1812 = vpop.f32.mrf.mxu0
    %v1813 = vadd.f32 %v1713, %v1812
    %v1814 = vpop.f32.mrf.mxu0
    %v1815 = vadd.f32 %v1713, %v1814
    %1816 = vmatmul.bf16.gmra.mxu0 %v1688
    %v1817 = vpop.f32.mrf.mxu0
    %v1818 = vadd.f32 %v1713, %v1817
    %v1819 = vpop.f32.mrf.mxu0
    %v1820 = vadd.f32 %v1713, %v1819
    %1821 = vmatmul.bf16.gmra.mxu0 %v1689
    %v1822 = vpop.f32.mrf.mxu0
    %v1823 = vadd.f32 %v1713, %v1822
    %v1824 = vpop.f32.mrf.mxu0
    %v1825 = vadd.f32 %v1713, %v1824
    %1826 = vmatmul.bf16.gmra.mxu0 %v1690
    %v1827 = vpop.f32.mrf.mxu0
    %v1828 = vadd.f32 %v1713, %v1827
    %v1829 = vpop.f32.mrf.mxu0
    %v1830 = vadd.f32 %v1713, %v1829
    %1831 = vmatmul.bf16.gmra.mxu0 %v1691
    %v1832 = vpop.f32.mrf.mxu0
    %v1833 = vadd.f32 %v1713, %v1832
    %v1834 = vpop.f32.mrf.mxu0
    %v1835 = vadd.f32 %v1713, %v1834
    %1836 = vmatmul.bf16.gmra.mxu0 %v1692
    %v1837 = vpop.f32.mrf.mxu0
    %v1838 = vadd.f32 %v1713, %v1837
    %v1839 = vpop.f32.mrf.mxu0
    %v1840 = vadd.f32 %v1713, %v1839
    %1841 = vmatmul.bf16.gmra.mxu0 %v1693
    %v1842 = vpop.f32.mrf.mxu0
    %v1843 = vadd.f32 %v1713, %v1842
    %v1844 = vpop.f32.mrf.mxu0
    %v1845 = vadd.f32 %v1713, %v1844
    %1846 = vmatmul.bf16.gmra.mxu0 %v1694
    %v1847 = vpop.f32.mrf.mxu0
    %v1848 = vadd.f32 %v1713, %v1847
    %v1849 = vpop.f32.mrf.mxu0
    %v1850 = vadd.f32 %v1713, %v1849
    %1851 = vdwg.mxu0
    %1852 = vmax.xlane.f32.xlu0 %v1773
    %v1853 = vpop.xlane.xlu0 %1852
    %1854 = vmax.xlane.f32.xlu0 %v1775
    %v1855 = vpop.xlane.xlu0 %1854
    %1856 = vmax.xlane.f32.xlu0 %v1778
    %v1857 = vpop.xlane.xlu0 %1856
    %1858 = vmax.xlane.f32.xlu0 %v1780
    %v1859 = vpop.xlane.xlu0 %1858
    %1860 = vmax.xlane.f32.xlu0 %v1783
    %v1861 = vpop.xlane.xlu0 %1860
    %1862 = vmax.xlane.f32.xlu0 %v1785
    %v1863 = vpop.xlane.xlu0 %1862
    %1864 = vmax.xlane.f32.xlu0 %v1788
    %v1865 = vpop.xlane.xlu0 %1864
    %1866 = vmax.xlane.f32.xlu0 %v1790
    %v1867 = vpop.xlane.xlu0 %1866
    %1868 = vmax.xlane.f32.xlu0 %v1793
    %v1869 = vpop.xlane.xlu0 %1868
    %1870 = vmax.xlane.f32.xlu0 %v1795
    %v1871 = vpop.xlane.xlu0 %1870
    %1872 = vmax.xlane.f32.xlu0 %v1798
    %v1873 = vpop.xlane.xlu0 %1872
    %1874 = vmax.xlane.f32.xlu0 %v1800
    %v1875 = vpop.xlane.xlu0 %1874
    %1876 = vmax.xlane.f32.xlu0 %v1803
    %v1877 = vpop.xlane.xlu0 %1876
    %1878 = vmax.xlane.f32.xlu0 %v1805
    %v1879 = vpop.xlane.xlu0 %1878
    %1880 = vmax.xlane.f32.xlu0 %v1808
    %v1881 = vpop.xlane.xlu0 %1880
    %1882 = vmax.xlane.f32.xlu0 %v1810
    %v1883 = vpop.xlane.xlu0 %1882
    %1884 = vmax.xlane.f32.xlu0 %v1813
    %v1885 = vpop.xlane.xlu0 %1884
    %1886 = vmax.xlane.f32.xlu0 %v1815
    %v1887 = vpop.xlane.xlu0 %1886
    %1888 = vmax.xlane.f32.xlu0 %v1818
    %v1889 = vpop.xlane.xlu0 %1888
    %1890 = vmax.xlane.f32.xlu0 %v1820
    %v1891 = vpop.xlane.xlu0 %1890
    %1892 = vmax.xlane.f32.xlu0 %v1823
    %v1893 = vpop.xlane.xlu0 %1892
    %1894 = vmax.xlane.f32.xlu0 %v1825
    %v1895 = vpop.xlane.xlu0 %1894
    %1896 = vmax.xlane.f32.xlu0 %v1828
    %v1897 = vpop.xlane.xlu0 %1896
    %1898 = vmax.xlane.f32.xlu0 %v1830
    %v1899 = vpop.xlane.xlu0 %1898
    %1900 = vmax.xlane.f32.xlu0 %v1833
    %v1901 = vpop.xlane.xlu0 %1900
    %1902 = vmax.xlane.f32.xlu0 %v1835
    %v1903 = vpop.xlane.xlu0 %1902
    %1904 = vmax.xlane.f32.xlu0 %v1838
    %v1905 = vpop.xlane.xlu0 %1904
    %1906 = vmax.xlane.f32.xlu0 %v1840
    %v1907 = vpop.xlane.xlu0 %1906
    %1908 = vmax.xlane.f32.xlu0 %v1843
    %v1909 = vpop.xlane.xlu0 %1908
    %1910 = vmax.xlane.f32.xlu0 %v1845
    %v1911 = vpop.xlane.xlu0 %1910
    %1912 = vmax.xlane.f32.xlu0 %v1848
    %v1913 = vpop.xlane.xlu0 %1912
    %1914 = vmax.xlane.f32.xlu0 %v1850
    %v1915 = vpop.xlane.xlu0 %1914
    %v1916 = vsub.f32 %v1773, %v1853
    %v1917 = vsub.f32 %v1775, %v1855
    %v1918 = vsub.f32 %v1778, %v1857
    %v1919 = vsub.f32 %v1780, %v1859
    %v1920 = vsub.f32 %v1783, %v1861
    %v1921 = vsub.f32 %v1785, %v1863
    %v1922 = vsub.f32 %v1788, %v1865
    %v1923 = vsub.f32 %v1790, %v1867
    %v1924 = vsub.f32 %v1793, %v1869
    %v1925 = vsub.f32 %v1795, %v1871
    %v1926 = vsub.f32 %v1798, %v1873
    %v1927 = vsub.f32 %v1800, %v1875
    %v1928 = vsub.f32 %v1803, %v1877
    %v1929 = vsub.f32 %v1805, %v1879
    %v1930 = vsub.f32 %v1808, %v1881
    %v1931 = vsub.f32 %v1810, %v1883
    %v1932 = vsub.f32 %v1813, %v1885
    %v1933 = vsub.f32 %v1815, %v1887
    %v1934 = vsub.f32 %v1818, %v1889
    %v1935 = vsub.f32 %v1820, %v1891
    %v1936 = vsub.f32 %v1823, %v1893
    %v1937 = vsub.f32 %v1825, %v1895
    %v1938 = vsub.f32 %v1828, %v1897
    %v1939 = vsub.f32 %v1830, %v1899
    %v1940 = vsub.f32 %v1833, %v1901
    %v1941 = vsub.f32 %v1835, %v1903
    %v1942 = vsub.f32 %v1838, %v1905
    %v1943 = vsub.f32 %v1840, %v1907
    %v1944 = vsub.f32 %v1843, %v1909
    %v1945 = vsub.f32 %v1845, %v1911
    %v1946 = vsub.f32 %v1848, %v1913
    %v1947 = vsub.f32 %v1850, %v1915
    %v1948 = vmul.f32 %v1916, 1.442695
    %v1949 = vpow.pop %v1948
    %v1950 = vmul.f32 %v1917, 1.442695
    %v1951 = vpow.pop %v1950
    %v1952 = vmul.f32 %v1918, 1.442695
    %v1953 = vpow.pop %v1952
    %v1954 = vmul.f32 %v1919, 1.442695
    %v1955 = vpow.pop %v1954
    %v1956 = vmul.f32 %v1920, 1.442695
    %v1957 = vpow.pop %v1956
    %v1958 = vmul.f32 %v1921, 1.442695
    %v1959 = vpow.pop %v1958
    %v1960 = vmul.f32 %v1922, 1.442695
    %v1961 = vpow.pop %v1960
    %v1962 = vmul.f32 %v1923, 1.442695
    %v1963 = vpow.pop %v1962
    %v1964 = vmul.f32 %v1924, 1.442695
    %v1965 = vpow.pop %v1964
    %v1966 = vmul.f32 %v1925, 1.442695
    %v1967 = vpow.pop %v1966
    %v1968 = vmul.f32 %v1926, 1.442695
    %v1969 = vpow.pop %v1968
    %v1970 = vmul.f32 %v1927, 1.442695
    %v1971 = vpow.pop %v1970
    %v1972 = vmul.f32 %v1928, 1.442695
    %v1973 = vpow.pop %v1972
    %v1974 = vmul.f32 %v1929, 1.442695
    %v1975 = vpow.pop %v1974
    %v1976 = vmul.f32 %v1930, 1.442695
    %v1977 = vpow.pop %v1976
    %v1978 = vmul.f32 %v1931, 1.442695
    %v1979 = vpow.pop %v1978
    %v1980 = vmul.f32 %v1932, 1.442695
    %v1981 = vpow.pop %v1980
    %v1982 = vmul.f32 %v1933, 1.442695
    %v1983 = vpow.pop %v1982
    %v1984 = vmul.f32 %v1934, 1.442695
    %v1985 = vpow.pop %v1984
    %v1986 = vmul.f32 %v1935, 1.442695
    %v1987 = vpow.pop %v1986
    %v1988 = vmul.f32 %v1936, 1.442695
    %v1989 = vpow.pop %v1988
    %v1990 = vmul.f32 %v1937, 1.442695
    %v1991 = vpow.pop %v1990
    %v1992 = vmul.f32 %v1938, 1.442695
    %v1993 = vpow.pop %v1992
    %v1994 = vmul.f32 %v1939, 1.442695
    %v1995 = vpow.pop %v1994
    %v1996 = vmul.f32 %v1940, 1.442695
    %v1997 = vpow.pop %v1996
    %v1998 = vmul.f32 %v1941, 1.442695
    %v1999 = vpow.pop %v1998
    %v2000 = vmul.f32 %v1942, 1.442695
    %v2001 = vpow.pop %v2000
    %v2002 = vmul.f32 %v1943, 1.442695
    %v2003 = vpow.pop %v2002
    %v2004 = vmul.f32 %v1944, 1.442695
    %v2005 = vpow.pop %v2004
    %v2006 = vmul.f32 %v1945, 1.442695
    %v2007 = vpow.pop %v2006
    %v2008 = vmul.f32 %v1946, 1.442695
    %v2009 = vpow.pop %v2008
    %v2010 = vmul.f32 %v1947, 1.442695
    %v2011 = vpow.pop %v2010
    %2012 = vadd.xlane.f32.xlu0 %v1949
    %v2013 = vpop.xlane.xlu0 %2012
    %2014 = vadd.xlane.f32.xlu0 %v1951
    %v2015 = vpop.xlane.xlu0 %2014
    %2016 = vadd.xlane.f32.xlu0 %v1953
    %v2017 = vpop.xlane.xlu0 %2016
    %2018 = vadd.xlane.f32.xlu0 %v1955
    %v2019 = vpop.xlane.xlu0 %2018
    %2020 = vadd.xlane.f32.xlu0 %v1957
    %v2021 = vpop.xlane.xlu0 %2020
    %2022 = vadd.xlane.f32.xlu0 %v1959
    %v2023 = vpop.xlane.xlu0 %2022
    %2024 = vadd.xlane.f32.xlu0 %v1961
    %v2025 = vpop.xlane.xlu0 %2024
    %2026 = vadd.xlane.f32.xlu0 %v1963
    %v2027 = vpop.xlane.xlu0 %2026
    %2028 = vadd.xlane.f32.xlu0 %v1965
    %v2029 = vpop.xlane.xlu0 %2028
    %2030 = vadd.xlane.f32.xlu0 %v1967
    %v2031 = vpop.xlane.xlu0 %2030
    %2032 = vadd.xlane.f32.xlu0 %v1969
    %v2033 = vpop.xlane.xlu0 %2032
    %2034 = vadd.xlane.f32.xlu0 %v1971
    %v2035 = vpop.xlane.xlu0 %2034
    %2036 = vadd.xlane.f32.xlu0 %v1973
    %v2037 = vpop.xlane.xlu0 %2036
    %2038 = vadd.xlane.f32.xlu0 %v1975
    %v2039 = vpop.xlane.xlu0 %2038
    %2040 = vadd.xlane.f32.xlu0 %v1977
    %v2041 = vpop.xlane.xlu0 %2040
    %2042 = vadd.xlane.f32.xlu0 %v1979
    %v2043 = vpop.xlane.xlu0 %2042
    %2044 = vadd.xlane.f32.xlu0 %v1981
    %v2045 = vpop.xlane.xlu0 %2044
    %2046 = vadd.xlane.f32.xlu0 %v1983
    %v2047 = vpop.xlane.xlu0 %2046
    %2048 = vadd.xlane.f32.xlu0 %v1985
    %v2049 = vpop.xlane.xlu0 %2048
    %2050 = vadd.xlane.f32.xlu0 %v1987
    %v2051 = vpop.xlane.xlu0 %2050
    %2052 = vadd.xlane.f32.xlu0 %v1989
    %v2053 = vpop.xlane.xlu0 %2052
    %2054 = vadd.xlane.f32.xlu0 %v1991
    %v2055 = vpop.xlane.xlu0 %2054
    %2056 = vadd.xlane.f32.xlu0 %v1993
    %v2057 = vpop.xlane.xlu0 %2056
    %2058 = vadd.xlane.f32.xlu0 %v1995
    %v2059 = vpop.xlane.xlu0 %2058
    %2060 = vadd.xlane.f32.xlu0 %v1997
    %v2061 = vpop.xlane.xlu0 %2060
    %2062 = vadd.xlane.f32.xlu0 %v1999
    %v2063 = vpop.xlane.xlu0 %2062
    %2064 = vadd.xlane.f32.xlu0 %v2001
    %v2065 = vpop.xlane.xlu0 %2064
    %2066 = vadd.xlane.f32.xlu0 %v2003
    %v2067 = vpop.xlane.xlu0 %2066
    %2068 = vadd.xlane.f32.xlu0 %v2005
    %v2069 = vpop.xlane.xlu0 %2068
    %2070 = vadd.xlane.f32.xlu0 %v2007
    %v2071 = vpop.xlane.xlu0 %2070
    %2072 = vadd.xlane.f32.xlu0 %v2009
    %v2073 = vpop.xlane.xlu0 %2072
    %2074 = vadd.xlane.f32.xlu0 %v2011
    %v2075 = vpop.xlane.xlu0 %2074
    %v2076 = vlog2.pop %v2013
    %v2077 = vmul.f32 %v2076, 0.6931472
    %v2078 = vlog2.pop %v2015
    %v2079 = vmul.f32 %v2078, 0.6931472
    %v2080 = vlog2.pop %v2017
    %v2081 = vmul.f32 %v2080, 0.6931472
    %v2082 = vlog2.pop %v2019
    %v2083 = vmul.f32 %v2082, 0.6931472
    %v2084 = vlog2.pop %v2021
    %v2085 = vmul.f32 %v2084, 0.6931472
    %v2086 = vlog2.pop %v2023
    %v2087 = vmul.f32 %v2086, 0.6931472
    %v2088 = vlog2.pop %v2025
    %v2089 = vmul.f32 %v2088, 0.6931472
    %v2090 = vlog2.pop %v2027
    %v2091 = vmul.f32 %v2090, 0.6931472
    %v2092 = vlog2.pop %v2029
    %v2093 = vmul.f32 %v2092, 0.6931472
    %v2094 = vlog2.pop %v2031
    %v2095 = vmul.f32 %v2094, 0.6931472
    %v2096 = vlog2.pop %v2033
    %v2097 = vmul.f32 %v2096, 0.6931472
    %v2098 = vlog2.pop %v2035
    %v2099 = vmul.f32 %v2098, 0.6931472
    %v2100 = vlog2.pop %v2037
    %v2101 = vmul.f32 %v2100, 0.6931472
    %v2102 = vlog2.pop %v2039
    %v2103 = vmul.f32 %v2102, 0.6931472
    %v2104 = vlog2.pop %v2041
    %v2105 = vmul.f32 %v2104, 0.6931472
    %v2106 = vlog2.pop %v2043
    %v2107 = vmul.f32 %v2106, 0.6931472
    %v2108 = vlog2.pop %v2045
    %v2109 = vmul.f32 %v2108, 0.6931472
    %v2110 = vlog2.pop %v2047
    %v2111 = vmul.f32 %v2110, 0.6931472
    %v2112 = vlog2.pop %v2049
    %v2113 = vmul.f32 %v2112, 0.6931472
    %v2114 = vlog2.pop %v2051
    %v2115 = vmul.f32 %v2114, 0.6931472
    %v2116 = vlog2.pop %v2053
    %v2117 = vmul.f32 %v2116, 0.6931472
    %v2118 = vlog2.pop %v2055
    %v2119 = vmul.f32 %v2118, 0.6931472
    %v2120 = vlog2.pop %v2057
    %v2121 = vmul.f32 %v2120, 0.6931472
    %v2122 = vlog2.pop %v2059
    %v2123 = vmul.f32 %v2122, 0.6931472
    %v2124 = vlog2.pop %v2061
    %v2125 = vmul.f32 %v2124, 0.6931472
    %v2126 = vlog2.pop %v2063
    %v2127 = vmul.f32 %v2126, 0.6931472
    %v2128 = vlog2.pop %v2065
    %v2129 = vmul.f32 %v2128, 0.6931472
    %v2130 = vlog2.pop %v2067
    %v2131 = vmul.f32 %v2130, 0.6931472
    %v2132 = vlog2.pop %v2069
    %v2133 = vmul.f32 %v2132, 0.6931472
    %v2134 = vlog2.pop %v2071
    %v2135 = vmul.f32 %v2134, 0.6931472
    %v2136 = vlog2.pop %v2073
    %v2137 = vmul.f32 %v2136, 0.6931472
    %v2138 = vlog2.pop %v2075
    %v2139 = vmul.f32 %v2138, 0.6931472
    %v2140 = vsub.f32 %v1916, %v2077
    %v2141 = vsub.f32 %v1917, %v2079
    %v2142 = vsub.f32 %v1918, %v2081
    %v2143 = vsub.f32 %v1919, %v2083
    %v2144 = vsub.f32 %v1920, %v2085
    %v2145 = vsub.f32 %v1921, %v2087
    %v2146 = vsub.f32 %v1922, %v2089
    %v2147 = vsub.f32 %v1923, %v2091
    %v2148 = vsub.f32 %v1924, %v2093
    %v2149 = vsub.f32 %v1925, %v2095
    %v2150 = vsub.f32 %v1926, %v2097
    %v2151 = vsub.f32 %v1927, %v2099
    %v2152 = vsub.f32 %v1928, %v2101
    %v2153 = vsub.f32 %v1929, %v2103
    %v2154 = vsub.f32 %v1930, %v2105
    %v2155 = vsub.f32 %v1931, %v2107
    %v2156 = vsub.f32 %v1932, %v2109
    %v2157 = vsub.f32 %v1933, %v2111
    %v2158 = vsub.f32 %v1934, %v2113
    %v2159 = vsub.f32 %v1935, %v2115
    %v2160 = vsub.f32 %v1936, %v2117
    %v2161 = vsub.f32 %v1937, %v2119
    %v2162 = vsub.f32 %v1938, %v2121
    %v2163 = vsub.f32 %v1939, %v2123
    %v2164 = vsub.f32 %v1940, %v2125
    %v2165 = vsub.f32 %v1941, %v2127
    %v2166 = vsub.f32 %v1942, %v2129
    %v2167 = vsub.f32 %v1943, %v2131
    %v2168 = vsub.f32 %v1944, %v2133
    %v2169 = vsub.f32 %v1945, %v2135
    %v2170 = vsub.f32 %v1946, %v2137
    %v2171 = vsub.f32 %v1947, %v2139
    %2172 = vst [vmem:[#allocation5] sm:$0xff] %v2140
    %2173 = vst [vmem:[#allocation5 + $0x8] sm:$0xff] %v2141
    %2174 = vst [vmem:[#allocation5 + $0x10] sm:$0xff] %v2142
    %2175 = vst [vmem:[#allocation5 + $0x18] sm:$0xff] %v2143
    %2176 = vst [vmem:[#allocation5 + $0x20] sm:$0xff] %v2144
    %2177 = vst [vmem:[#allocation5 + $0x28] sm:$0xff] %v2145
    %2178 = vst [vmem:[#allocation5 + $0x30] sm:$0xff] %v2146
    %2179 = vst [vmem:[#allocation5 + $0x38] sm:$0xff] %v2147
    %2180 = vst [vmem:[#allocation5 + $0x40] sm:$0xff] %v2148
    %2181 = vst [vmem:[#allocation5 + $0x48] sm:$0xff] %v2149
    %2182 = vst [vmem:[#allocation5 + $0x50] sm:$0xff] %v2150
    %2183 = vst [vmem:[#allocation5 + $0x58] sm:$0xff] %v2151
    %2184 = vst [vmem:[#allocation5 + $0x60] sm:$0xff] %v2152
    %2185 = vst [vmem:[#allocation5 + $0x68] sm:$0xff] %v2153
    %2186 = vst [vmem:[#allocation5 + $0x70] sm:$0xff] %v2154
    %2187 = vst [vmem:[#allocation5 + $0x78] sm:$0xff] %v2155
    %2188 = vst [vmem:[#allocation5 + $0x80] sm:$0xff] %v2156
    %2189 = vst [vmem:[#allocation5 + $0x88] sm:$0xff] %v2157
    %2190 = vst [vmem:[#allocation5 + $0x90] sm:$0xff] %v2158
    %2191 = vst [vmem:[#allocation5 + $0x98] sm:$0xff] %v2159
    %2192 = vst [vmem:[#allocation5 + $0xa0] sm:$0xff] %v2160
    %2193 = vst [vmem:[#allocation5 + $0xa8] sm:$0xff] %v2161
    %2194 = vst [vmem:[#allocation5 + $0xb0] sm:$0xff] %v2162
    %2195 = vst [vmem:[#allocation5 + $0xb8] sm:$0xff] %v2163
    %2196 = vst [vmem:[#allocation5 + $0xc0] sm:$0xff] %v2164
    %2197 = vst [vmem:[#allocation5 + $0xc8] sm:$0xff] %v2165
    %2198 = vst [vmem:[#allocation5 + $0xd0] sm:$0xff] %v2166
    %2199 = vst [vmem:[#allocation5 + $0xd8] sm:$0xff] %v2167
    %2200 = vst [vmem:[#allocation5 + $0xe0] sm:$0xff] %v2168
    %2201 = vst [vmem:[#allocation5 + $0xe8] sm:$0xff] %v2169
    %2202 = vst [vmem:[#allocation5 + $0xf0] sm:$0xff] %v2170
    %2203 = vst [vmem:[#allocation5 + $0xf8] sm:$0xff] %v2171
    // Predicated region
    $region26: #{tpu_custom_call.1} parent=1 // pred_check
      _
    $region27: #{tpu_custom_call.1} parent=1 // pred_check_branch
      %2205 = sbr.rel (0) target = $region29
    $region28: #{tpu_custom_call.1} parent=1 // pred_region
      %2207 = vsyncadd [#allocation4], 0
      %s2208 = sshll.u32 [#allocation5], 4
      %s2209 = int_to_ptr.vmem [resolvable:$true] %s2208
      %s2210 = sshll.u32 %s5, 4
      %s2211 = int_to_ptr.hbm [resolvable:$true] %s2210
      %2216 = dma.vmem_to_hbm [thread:$0]  %s2209, 4096, %s2211, [#allocation4], 128, 128, 8
    $region29: #{tpu_custom_call.1} parent=1 // pred_fallthru
      _
    // Predicated region
    $region30: #{tpu_custom_call.1} parent=1 // pred_check
      _
    $region31: #{tpu_custom_call.1} parent=1 // pred_check_branch
      %2218 = sbr.rel (0) target = $region33
    $region32: #{tpu_custom_call.1} parent=1 // pred_region
      %2220 = dma.done [#allocation4], 4096
    $region33: #{tpu_custom_call.1} parent=1 // pred_fallthru
      _
    %2221 = vsyncpa [#allocation3], 1
    %2222 = vsyncpa [#allocation4], 1

</llo_original>
